<compile_context>
chip_gen: v5e
topology: v5e:2x2
jax: 0.10.0
libtpu: 0.0.40
codegen_flags: <defaults>
</compile_context>

<pallas_src>
import functools

import numpy as np
import jax
import jax.numpy as jnp
from jax.experimental import pallas as pl
from jax.experimental.pallas import tpu as pltpu

EPS = 1e-5  # PyTorch LayerNorm default eps


# ----------------------------------------------------------------------------
# small helpers used inside kernels (all f32 elementwise)
# ----------------------------------------------------------------------------
def _layer_norm(x, g, b):
    mu = jnp.mean(x, axis=-1, keepdims=True)
    var = jnp.mean((x - mu) ** 2, axis=-1, keepdims=True)
    return (x - mu) * jax.lax.rsqrt(var + EPS) * g + b


def _gelu(x):
    # TODO(synk): PyTorch nn.GELU default is the exact erf form; tanh
    # approximation kept for robust Mosaic lowering (~1e-3 rel. diff).
    c = 0.7978845608028654  # sqrt(2/pi)
    return 0.5 * x * (1.0 + jnp.tanh(c * (x + 0.044715 * x * x * x)))


def _vmem_limit_bytes():
    # ~3/4 of physical VMEM: 96 MiB on v5e/v6e (128 MiB), 48 MiB on v7x (64 MiB/TC).
    try:
        cap = int(getattr(pltpu.get_tpu_info(), "vmem_capacity_bytes", 0))
    except Exception:
        cap = 0
    if cap <= 0:
        cap = 64 * 1024 * 1024
    return (cap * 3) // 4


def _auto_batch_block(B, tok):
    divs = [d for d in range(1, B + 1) if B % d == 0]
    for d in divs:                        # smallest chunk giving >=128 MXU rows
        if d * tok >= 128:
            return d
    two = [d for d in divs if B // d >= 2]  # keep >=2 chunks for v7x's 2 TCs
    return two[-1] if two else B


# ----------------------------------------------------------------------------
# fused kernel: patchify + pos + cls (at l==0), all ViT pre-norm blocks,
# final LayerNorm (at l==L-1).  grid = (batch_chunks, num_layer).
# ----------------------------------------------------------------------------
def _encoder_kernel(num_head, weights_resident,
                    xk_ref, posk_ref, cls_ref, convw_ref, convb_ref,
                    ln1g, ln1b, wqkv, bqkv, wo, bo,
                    ln2g, ln2b, w1, b1, w2, b2,
                    lng, lnb,
                    o_ref, acc_ref):
    l = pl.program_id(1)
    n_layer = pl.num_programs(1)
    li = l if weights_resident else 0

    bc, T, C = acc_ref.shape
    nh = num_head
    Dh = C // nh
    N = bc * T
    scale = 1.0 / (float(Dh) ** 0.5)

    @pl.when(l == 0)
    def _():
        # patchify (Conv1d stride==kernel as a matmul) + bias + pos-embedding,
        # then prepend the cls token -> write activations into VMEM scratch.
        bcx, rT, K = xk_ref.shape
        convw = convw_ref[...]
        patch = (jnp.dot(xk_ref[...].reshape(bcx * rT, K).astype(convw.dtype),
                         convw, preferred_element_type=jnp.float32)
                 + convb_ref[...]
                 + posk_ref[...].reshape(bcx * rT, C)).reshape(bcx, rT, C)
        cls_rows = jnp.broadcast_to(cls_ref[...].reshape(1, 1, C), (bcx, 1, C))
        acc_ref[...] = jnp.concatenate([cls_rows, patch], axis=1)

    xb = acc_ref[...]                      # (bc, T, C) f32, VMEM resident
    x2 = xb.reshape(N, C)

    # --- attention (pre-LN), fused QKV projection, batched over (head,batch)
    h = _layer_norm(x2, ln1g[li], ln1b[li])
    wqkv_l = wqkv[li]
    qkv = jnp.dot(h.astype(wqkv_l.dtype), wqkv_l,
                  preferred_element_type=jnp.float32) + bqkv[li]
    qkv3 = qkv.reshape(bc, T, 3 * C)

    def _heads(base):
        # static lane slices per head stacked into the matmul batch dim
        # -> (nh*bc, T, Dh), head-major (no 4-D transposes).
        return jnp.concatenate(
            [qkv3[:, :, base + hd * Dh: base + (hd + 1) * Dh]
             for hd in range(nh)], axis=0)

    qh = _heads(0).astype(jnp.bfloat16)
    kh = _heads(C).astype(jnp.bfloat16)
    vh = _heads(2 * C).astype(jnp.bfloat16)

    s = jnp.einsum("bqd,bkd->bqk", qh, kh,
                   preferred_element_type=jnp.float32) * scale
    s = s - jnp.max(s, axis=-1, keepdims=True)
    p = jnp.exp(s)
    p = p * pl.reciprocal(jnp.sum(p, axis=-1, keepdims=True), approx=True)

    oh = jnp.einsum("bqk,bkd->bqd", p.astype(jnp.bfloat16), vh,
                    preferred_element_type=jnp.float32)       # (nh*bc, T, Dh)
    ctx = jnp.concatenate([oh[hd * bc:(hd + 1) * bc] for hd in range(nh)],
                          axis=-1).reshape(N, C)              # lane concat

    wo_l = wo[li]
    attn = jnp.dot(ctx.astype(wo_l.dtype), wo_l,
                   preferred_element_type=jnp.float32) + bo[li]
    x2 = x2 + attn

    # --- MLP ---
    h = _layer_norm(x2, ln2g[li], ln2b[li])
    w1_l = w1[li]
    w2_l = w2[li]
    h = _gelu(jnp.dot(h.astype(w1_l.dtype), w1_l,
                      preferred_element_type=jnp.float32) + b1[li])
    h = jnp.dot(h.astype(w2_l.dtype), w2_l,
                preferred_element_type=jnp.float32) + b2[li]
    y = x2 + h

    acc_ref[...] = y.reshape(bc, T, C)     # stay resident across layers

    @pl.when(l == n_layer - 1)
    def _():                               # final LayerNorm folded in
        o_ref[...] = _layer_norm(y, lng[...], lnb[...]).reshape(bc, T, C)


def encoder_stack(x_kept, pos_kept, cls, conv_w, conv_b, blocks, ln_g, ln_b, *,
                  num_head, batch_block=None, vmem_limit=None):
    B, rT, K = x_kept.shape
    E = conv_w.shape[1]
    T_tok = rT + 1
    L = blocks["wqkv"].shape[0]
    assert E % num_head == 0

    if vmem_limit is None:
        vmem_limit = _vmem_limit_bytes()
    if batch_block is None:
        batch_block = _auto_batch_block(B, T_tok)
    assert B % batch_block == 0
    bc = batch_block

    names = ("ln1g", "ln1b", "wqkv", "bqkv", "wo", "bo",
             "ln2g", "ln2b", "w1", "b1", "w2", "b2")
    ws = [blocks[n] for n in names]
    w_bytes = sum(int(np.prod(w.shape)) * w.dtype.itemsize for w in ws)
    # keep the whole per-layer weight stack resident in VMEM (one DMA total)
    # when it is small relative to the budget; otherwise stream per layer.
    weights_resident = w_bytes <= vmem_limit // 4
    if weights_resident:
        w_specs = [pl.BlockSpec(w.shape, lambda b, l: (0, 0, 0)) for w in ws]
    else:
        w_specs = [pl.BlockSpec((1,) + w.shape[1:], lambda b, l: (l, 0, 0))
                   for w in ws]

    in_specs = ([pl.BlockSpec((bc, rT, K), lambda b, l: (b, 0, 0)),
                 pl.BlockSpec((bc, rT, E), lambda b, l: (b, 0, 0)),
                 pl.BlockSpec((1, E), lambda b, l: (0, 0)),
                 pl.BlockSpec(conv_w.shape, lambda b, l: (0, 0)),
                 pl.BlockSpec((1, E), lambda b, l: (0, 0))]
                + w_specs
                + [pl.BlockSpec((1, E), lambda b, l: (0, 0)),
                   pl.BlockSpec((1, E), lambda b, l: (0, 0))])
    out_spec = pl.BlockSpec((bc, T_tok, E), lambda b, l: (b, 0, 0))

    return pl.pallas_call(
        functools.partial(_encoder_kernel, num_head, weights_resident),
        out_shape=jax.ShapeDtypeStruct((B, T_tok, E), jnp.float32),
        grid=(B // bc, L),
        in_specs=in_specs,
        out_specs=out_spec,
        scratch_shapes=[pltpu.VMEM((bc, T_tok, E), jnp.float32)],
        compiler_params=pltpu.CompilerParams(
            dimension_semantics=("parallel", "arbitrary"),
            vmem_limit_bytes=vmem_limit),
    )(x_kept, pos_kept, cls, conv_w, conv_b, *ws, ln_g, ln_b)


# ----------------------------------------------------------------------------
# parameter init (deterministic, synthetic; mirrors the shapes in __init__).
# Matmul weights stacked per layer, stored in bf16 (MXU fast path).
# ----------------------------------------------------------------------------
def init_params(key, *, image_size, patch_size, emb_dim, num_layer, input_dim):
    std = 0.02
    T = image_size // patch_size
    hidden = 4 * emb_dim
    K = input_dim * patch_size
    keys = jax.random.split(key, 4)

    def nrm(k, shape):
        return jax.random.normal(k, shape, jnp.float32) * std

    conv_w = nrm(keys[2], (emb_dim, input_dim, patch_size))   # torch Conv1d layout
    conv_w_flat = conv_w.reshape(emb_dim, K).T                # (K, E) matmul layout

    layer_keys = jax.random.split(keys[3], num_layer)
    wqkv, wo, w1, w2 = [], [], [], []
    for lk in layer_keys:
        bk = jax.random.split(lk, 4)
        wqkv.append(nrm(bk[0], (emb_dim, 3 * emb_dim)))
        wo.append(nrm(bk[1], (emb_dim, emb_dim)))
        w1.append(nrm(bk[2], (emb_dim, hidden)))
        w2.append(nrm(bk[3], (hidden, emb_dim)))

    blocks = {
        "ln1g": jnp.ones((num_layer, 1, emb_dim), jnp.float32),
        "ln1b": jnp.zeros((num_layer, 1, emb_dim), jnp.float32),
        "wqkv": jnp.stack(wqkv).astype(jnp.bfloat16),
        "bqkv": jnp.zeros((num_layer, 1, 3 * emb_dim), jnp.float32),
        "wo": jnp.stack(wo).astype(jnp.bfloat16),
        "bo": jnp.zeros((num_layer, 1, emb_dim), jnp.float32),
        "ln2g": jnp.ones((num_layer, 1, emb_dim), jnp.float32),
        "ln2b": jnp.zeros((num_layer, 1, emb_dim), jnp.float32),
        "w1": jnp.stack(w1).astype(jnp.bfloat16),
        "b1": jnp.zeros((num_layer, 1, hidden), jnp.float32),
        "w2": jnp.stack(w2).astype(jnp.bfloat16),
        "b2": jnp.zeros((num_layer, 1, emb_dim), jnp.float32),
    }
    return {
        "cls_token": nrm(keys[0], (1, 1, emb_dim)),
        "pos_embedding": nrm(keys[1], (T, 1, emb_dim)),
        "conv_w": conv_w_flat.astype(jnp.bfloat16),   # (K, E) bf16
        "conv_b": jnp.zeros((emb_dim,), jnp.float32),
        "ln_g": jnp.ones((1, emb_dim), jnp.float32),
        "ln_b": jnp.zeros((1, emb_dim), jnp.float32),
        "blocks": blocks,
    }


# ----------------------------------------------------------------------------
# full forward: thin XLA glue (patch-row reshape, host-RNG shuffle gather),
# one fused Pallas kernel for everything else.
# ----------------------------------------------------------------------------
def mae_encoder_forward(img, params, *, patch_size, mask_ratio, num_head,
                        shuffle_seed=0, batch_block=None):
    B, C_in, Lspace = img.shape
    E = params["conv_w"].shape[1]
    T = Lspace // patch_size
    K = C_in * patch_size

    # Conv1d(stride == kernel) == per-token matmul on flattened patch rows.
    x = img.reshape(B, C_in, T, patch_size).transpose(0, 2, 1, 3).reshape(B, T, K)

    # PatchShuffle (host RNG + gather; matches np.random semantics of the ref)
    # TODO(synk): np.random permutation has no in-kernel equivalent; kept host-side.
    rng = np.random.default_rng(shuffle_seed)
    fwd = np.stack([rng.permutation(T) for _ in range(B)], axis=-1).astype(np.int32)
    bwd = np.argsort(fwd, axis=0).astype(np.int32)            # (T, B)
    remain_T = int(T * (1 - mask_ratio))
    sel = jnp.asarray(fwd[:remain_T].T)                       # (B, remain_T)

    # Keep/shuffle BEFORE the patch matmul (per-token op -> identical result):
    # discarded tokens are never patchified and the full patch tensor never
    # round-trips to HBM between kernels.
    x_kept = jnp.take_along_axis(x, sel[:, :, None], axis=1)          # (B,rT,K)
    pos_kept = jnp.take(params["pos_embedding"].reshape(T, E), sel, axis=0)

    feats = encoder_stack(
        x_kept, pos_kept,
        params["cls_token"].reshape(1, E),
        params["conv_w"], params["conv_b"].reshape(1, E),
        params["blocks"], params["ln_g"], params["ln_b"],
        num_head=num_head, batch_block=batch_block)            # (B, rT+1, E)

    features = jnp.transpose(feats, (1, 0, 2))                 # (t, B, C)
    return features, jnp.asarray(bwd)


# ----------------------------------------------------------------------------
if __name__ == "__main__":
    # small config consistent with the module's forward
    B = 2
    input_dim = 8
    image_size = 32
    patch_size = 4
    emb_dim = 32
    num_layer = 2
    num_head = 2
    mask_ratio = 0.5

    key = jax.random.PRNGKey(0)
    k_img, k_par = jax.random.split(key)
    img = jax.random.normal(k_img, (B, input_dim, image_size), jnp.float32)

    params = init_params(k_par, image_size=image_size, patch_size=patch_size,
                         emb_dim=emb_dim, num_layer=num_layer, input_dim=input_dim)

    features, backward_indexes = mae_encoder_forward(
        img, params, patch_size=patch_size, mask_ratio=mask_ratio,
        num_head=num_head, shuffle_seed=0, batch_block=None)

    features = jax.block_until_ready(features)
    backward_indexes = jax.block_until_ready(backward_indexes)

    expected_t = int((image_size // patch_size) * (1 - mask_ratio)) + 1
    assert features.shape == (expected_t, B, emb_dim), features.shape
    assert backward_indexes.shape == (image_size // patch_size, B)
    assert bool(jnp.all(jnp.isfinite(features)))
    print("KERNEL_OK")
</pallas_src>

<mosaic_0001>
module attributes {stable_mosaic.version = 11 : i64} {
  func.func @_encoder_kernel(%arg0: i32, %arg1: i32, %arg2: memref<1x4x32xf32, #tpu.memory_space<vmem>>, %arg3: memref<1x4x32xf32, #tpu.memory_space<vmem>>, %arg4: memref<1x32xf32, #tpu.memory_space<vmem>>, %arg5: memref<32x32xbf16, #tpu.memory_space<vmem>>, %arg6: memref<1x32xf32, #tpu.memory_space<vmem>>, %arg7: memref<2x1x32xf32, #tpu.memory_space<vmem>>, %arg8: memref<2x1x32xf32, #tpu.memory_space<vmem>>, %arg9: memref<2x32x96xbf16, #tpu.memory_space<vmem>>, %arg10: memref<2x1x96xf32, #tpu.memory_space<vmem>>, %arg11: memref<2x32x32xbf16, #tpu.memory_space<vmem>>, %arg12: memref<2x1x32xf32, #tpu.memory_space<vmem>>, %arg13: memref<2x1x32xf32, #tpu.memory_space<vmem>>, %arg14: memref<2x1x32xf32, #tpu.memory_space<vmem>>, %arg15: memref<2x32x128xbf16, #tpu.memory_space<vmem>>, %arg16: memref<2x1x128xf32, #tpu.memory_space<vmem>>, %arg17: memref<2x128x32xbf16, #tpu.memory_space<vmem>>, %arg18: memref<2x1x32xf32, #tpu.memory_space<vmem>>, %arg19: memref<1x32xf32, #tpu.memory_space<vmem>>, %arg20: memref<1x32xf32, #tpu.memory_space<vmem>>, %arg21: memref<1x5x32xf32, #tpu.memory_space<vmem>>, %arg22: memref<1x5x32xf32, #tpu.memory_space<vmem>>) attributes {dimension_semantics = [#tpu.dimension_semantics<parallel>, #tpu.dimension_semantics<arbitrary>], iteration_bounds = array<i64: 2, 2>, scalar_prefetch = 0 : i64, scratch_operands = 1 : i64, tpu.core_type = #tpu.core_type<tc>, window_params = [{transform_indices = @transform_0, window_bounds = array<i64: 1, 4, 32>}, {transform_indices = @transform_1, window_bounds = array<i64: 1, 4, 32>}, {pipeline_mode = #tpu.pipeline_mode<synchronous>, transform_indices = @transform_2, window_bounds = array<i64: 1, 32>}, {pipeline_mode = #tpu.pipeline_mode<synchronous>, transform_indices = @transform_3, window_bounds = array<i64: 32, 32>}, {pipeline_mode = #tpu.pipeline_mode<synchronous>, transform_indices = @transform_4, window_bounds = array<i64: 1, 32>}, {pipeline_mode = #tpu.pipeline_mode<synchronous>, transform_indices = @transform_5, window_bounds = array<i64: 2, 1, 32>}, {pipeline_mode = #tpu.pipeline_mode<synchronous>, transform_indices = @transform_6, window_bounds = array<i64: 2, 1, 32>}, {pipeline_mode = #tpu.pipeline_mode<synchronous>, transform_indices = @transform_7, window_bounds = array<i64: 2, 32, 96>}, {pipeline_mode = #tpu.pipeline_mode<synchronous>, transform_indices = @transform_8, window_bounds = array<i64: 2, 1, 96>}, {pipeline_mode = #tpu.pipeline_mode<synchronous>, transform_indices = @transform_9, window_bounds = array<i64: 2, 32, 32>}, {pipeline_mode = #tpu.pipeline_mode<synchronous>, transform_indices = @transform_10, window_bounds = array<i64: 2, 1, 32>}, {pipeline_mode = #tpu.pipeline_mode<synchronous>, transform_indices = @transform_11, window_bounds = array<i64: 2, 1, 32>}, {pipeline_mode = #tpu.pipeline_mode<synchronous>, transform_indices = @transform_12, window_bounds = array<i64: 2, 1, 32>}, {pipeline_mode = #tpu.pipeline_mode<synchronous>, transform_indices = @transform_13, window_bounds = array<i64: 2, 32, 128>}, {pipeline_mode = #tpu.pipeline_mode<synchronous>, transform_indices = @transform_14, window_bounds = array<i64: 2, 1, 128>}, {pipeline_mode = #tpu.pipeline_mode<synchronous>, transform_indices = @transform_15, window_bounds = array<i64: 2, 128, 32>}, {pipeline_mode = #tpu.pipeline_mode<synchronous>, transform_indices = @transform_16, window_bounds = array<i64: 2, 1, 32>}, {pipeline_mode = #tpu.pipeline_mode<synchronous>, transform_indices = @transform_17, window_bounds = array<i64: 1, 32>}, {pipeline_mode = #tpu.pipeline_mode<synchronous>, transform_indices = @transform_18, window_bounds = array<i64: 1, 32>}, {transform_indices = @transform_19, window_bounds = array<i64: 1, 5, 32>}]} {
    %c0_i32 = arith.constant 0 : i32
    %0 = arith.cmpi eq, %arg1, %c0_i32 : i32
    %1 = arith.extui %0 : i1 to i32
    %c0_i32_0 = arith.constant 0 : i32
    %2 = arith.cmpi ne, %1, %c0_i32_0 : i32
    scf.if %2 {
      %c0_53 = arith.constant 0 : index
      %c0_54 = arith.constant 0 : index
      %153 = vector.load %arg5[%c0_53, %c0_54] : memref<32x32xbf16, #tpu.memory_space<vmem>>, vector<32x32xbf16>
      %c0_55 = arith.constant 0 : index
      %c0_56 = arith.constant 0 : index
      %c0_57 = arith.constant 0 : index
      %154 = vector.load %arg2[%c0_55, %c0_56, %c0_57] : memref<1x4x32xf32, #tpu.memory_space<vmem>>, vector<1x4x32xf32>
      %155 = vector.shape_cast %154 : vector<1x4x32xf32> to vector<4x32xf32>
      %156 = arith.truncf %155 : vector<4x32xf32> to vector<4x32xbf16>
      %cst_58 = arith.constant dense<0.000000e+00> : vector<4x32xf32>
      %157 = tpu.matmul %156, %153, %cst_58 {dimension_numbers = #tpu.dot_dimension_numbers<[1], [0], [0], [1], [0, 0, 1, 1], [], []>} : vector<4x32xbf16>, vector<32x32xbf16>, vector<4x32xf32> -> vector<4x32xf32>
      %c0_59 = arith.constant 0 : index
      %c0_60 = arith.constant 0 : index
      %158 = vector.load %arg6[%c0_59, %c0_60] : memref<1x32xf32, #tpu.memory_space<vmem>>, vector<1x32xf32>
      %159 = vector.broadcast %158 : vector<1x32xf32> to vector<4x32xf32>
      %160 = arith.addf %157, %159 : vector<4x32xf32>
      %c0_61 = arith.constant 0 : index
      %c0_62 = arith.constant 0 : index
      %c0_63 = arith.constant 0 : index
      %161 = vector.load %arg3[%c0_61, %c0_62, %c0_63] : memref<1x4x32xf32, #tpu.memory_space<vmem>>, vector<1x4x32xf32>
      %162 = vector.shape_cast %161 : vector<1x4x32xf32> to vector<4x32xf32>
      %163 = arith.addf %160, %162 : vector<4x32xf32>
      %164 = vector.shape_cast %163 : vector<4x32xf32> to vector<1x4x32xf32>
      %c0_64 = arith.constant 0 : index
      %c0_65 = arith.constant 0 : index
      %165 = vector.load %arg4[%c0_64, %c0_65] : memref<1x32xf32, #tpu.memory_space<vmem>>, vector<1x32xf32>
      %166 = vector.shape_cast %165 : vector<1x32xf32> to vector<1x1x32xf32>
      %167 = tpu.concatenate %166, %164 in 1 : vector<1x1x32xf32>, vector<1x4x32xf32> -> vector<1x5x32xf32>
      %c0_66 = arith.constant 0 : index
      %c0_67 = arith.constant 0 : index
      %c0_68 = arith.constant 0 : index
      %168 = vector.load %arg22[%c0_66, %c0_67, %c0_68] : memref<1x5x32xf32, #tpu.memory_space<vmem>>, vector<1x5x32xf32>
      tpu.vector_store %arg22[%c0_66, %c0_67, %c0_68], %167 {strides = array<i32>} : memref<1x5x32xf32, #tpu.memory_space<vmem>>, vector<1x5x32xf32>,
    } else {
    }
    %c0 = arith.constant 0 : index
    %c0_1 = arith.constant 0 : index
    %c0_2 = arith.constant 0 : index
    %3 = vector.load %arg22[%c0, %c0_1, %c0_2] : memref<1x5x32xf32, #tpu.memory_space<vmem>>, vector<1x5x32xf32>
    %4 = vector.shape_cast %3 : vector<1x5x32xf32> to vector<5x32xf32>
    %5 = arith.index_cast %arg1 : i32 to index
    %c0_3 = arith.constant 0 : index
    %c0_4 = arith.constant 0 : index
    %6 = vector.load %arg7[%5, %c0_3, %c0_4] : memref<2x1x32xf32, #tpu.memory_space<vmem>>, vector<1x1x32xf32>
    %7 = vector.shape_cast %6 : vector<1x1x32xf32> to vector<1x32xf32>
    %8 = arith.index_cast %arg1 : i32 to index
    %c0_5 = arith.constant 0 : index
    %c0_6 = arith.constant 0 : index
    %9 = vector.load %arg8[%8, %c0_5, %c0_6] : memref<2x1x32xf32, #tpu.memory_space<vmem>>, vector<1x1x32xf32>
    %10 = vector.shape_cast %9 : vector<1x1x32xf32> to vector<1x32xf32>
    %cst = arith.constant dense<0.000000e+00> : vector<5xf32>
    %11 = vector.multi_reduction <add>, %4, %cst [1] : vector<5x32xf32> to vector<5xf32>
    %12 = vector.shape_cast %11 : vector<5xf32> to vector<5x1xf32>
    %cst_7 = arith.constant 3.200000e+01 : f32
    %13 = vector.broadcast %cst_7 : f32 to vector<5x1xf32>
    %14 = arith.divf %12, %13 : vector<5x1xf32>
    %15 = vector.broadcast %14 : vector<5x1xf32> to vector<5x32xf32>
    %16 = arith.subf %4, %15 : vector<5x32xf32>
    %17 = arith.mulf %16, %16 : vector<5x32xf32>
    %cst_8 = arith.constant dense<0.000000e+00> : vector<5xf32>
    %18 = vector.multi_reduction <add>, %17, %cst_8 [1] : vector<5x32xf32> to vector<5xf32>
    %19 = vector.shape_cast %18 : vector<5xf32> to vector<5x1xf32>
    %cst_9 = arith.constant 3.200000e+01 : f32
    %20 = vector.broadcast %cst_9 : f32 to vector<5x1xf32>
    %21 = arith.divf %19, %20 : vector<5x1xf32>
    %22 = vector.broadcast %14 : vector<5x1xf32> to vector<5x32xf32>
    %23 = arith.subf %4, %22 : vector<5x32xf32>
    %cst_10 = arith.constant 9.99999974E-6 : f32
    %24 = vector.broadcast %cst_10 : f32 to vector<5x1xf32>
    %25 = arith.addf %21, %24 : vector<5x1xf32>
    %26 = math.rsqrt %25 : vector<5x1xf32>
    %27 = vector.broadcast %26 : vector<5x1xf32> to vector<5x32xf32>
    %28 = arith.mulf %23, %27 : vector<5x32xf32>
    %29 = vector.broadcast %7 : vector<1x32xf32> to vector<5x32xf32>
    %30 = arith.mulf %28, %29 : vector<5x32xf32>
    %31 = vector.broadcast %10 : vector<1x32xf32> to vector<5x32xf32>
    %32 = arith.addf %30, %31 : vector<5x32xf32>
    %33 = arith.index_cast %arg1 : i32 to index
    %c0_11 = arith.constant 0 : index
    %c0_12 = arith.constant 0 : index
    %34 = vector.load %arg9[%33, %c0_11, %c0_12] : memref<2x32x96xbf16, #tpu.memory_space<vmem>>, vector<1x32x96xbf16>
    %35 = vector.shape_cast %34 : vector<1x32x96xbf16> to vector<32x96xbf16>
    %36 = arith.truncf %32 : vector<5x32xf32> to vector<5x32xbf16>
    %cst_13 = arith.constant dense<0.000000e+00> : vector<5x96xf32>
    %37 = tpu.matmul %36, %35, %cst_13 {dimension_numbers = #tpu.dot_dimension_numbers<[1], [0], [0], [1], [0, 0, 1, 1], [], []>} : vector<5x32xbf16>, vector<32x96xbf16>, vector<5x96xf32> -> vector<5x96xf32>
    %38 = arith.index_cast %arg1 : i32 to index
    %c0_14 = arith.constant 0 : index
    %c0_15 = arith.constant 0 : index
    %39 = vector.load %arg10[%38, %c0_14, %c0_15] : memref<2x1x96xf32, #tpu.memory_space<vmem>>, vector<1x1x96xf32>
    %40 = vector.shape_cast %39 : vector<1x1x96xf32> to vector<1x96xf32>
    %41 = vector.broadcast %40 : vector<1x96xf32> to vector<5x96xf32>
    %42 = arith.addf %37, %41 : vector<5x96xf32>
    %43 = vector.shape_cast %42 : vector<5x96xf32> to vector<1x5x96xf32>
    %44 = vector.extract_strided_slice %43 {offsets = [0, 0, 0], sizes = [1, 5, 16], strides = [1, 1, 1]} : vector<1x5x96xf32> to vector<1x5x16xf32>
    %45 = vector.extract_strided_slice %43 {offsets = [0, 0, 16], sizes = [1, 5, 16], strides = [1, 1, 1]} : vector<1x5x96xf32> to vector<1x5x16xf32>
    %46 = tpu.concatenate %44, %45 in 0 : vector<1x5x16xf32>, vector<1x5x16xf32> -> vector<2x5x16xf32>
    %47 = arith.truncf %46 : vector<2x5x16xf32> to vector<2x5x16xbf16>
    %48 = vector.extract_strided_slice %43 {offsets = [0, 0, 32], sizes = [1, 5, 16], strides = [1, 1, 1]} : vector<1x5x96xf32> to vector<1x5x16xf32>
    %49 = vector.extract_strided_slice %43 {offsets = [0, 0, 48], sizes = [1, 5, 16], strides = [1, 1, 1]} : vector<1x5x96xf32> to vector<1x5x16xf32>
    %50 = tpu.concatenate %48, %49 in 0 : vector<1x5x16xf32>, vector<1x5x16xf32> -> vector<2x5x16xf32>
    %51 = arith.truncf %50 : vector<2x5x16xf32> to vector<2x5x16xbf16>
    %52 = vector.extract_strided_slice %43 {offsets = [0, 0, 64], sizes = [1, 5, 16], strides = [1, 1, 1]} : vector<1x5x96xf32> to vector<1x5x16xf32>
    %53 = vector.extract_strided_slice %43 {offsets = [0, 0, 80], sizes = [1, 5, 16], strides = [1, 1, 1]} : vector<1x5x96xf32> to vector<1x5x16xf32>
    %54 = tpu.concatenate %52, %53 in 0 : vector<1x5x16xf32>, vector<1x5x16xf32> -> vector<2x5x16xf32>
    %55 = arith.truncf %54 : vector<2x5x16xf32> to vector<2x5x16xbf16>
    "tpu.trace_start"() <{level = 10 : i32, message = "bqd,bkd->bqk"}> : () -> ()
    %cst_16 = arith.constant dense<0.000000e+00> : vector<2x5x5xf32>
    %56 = tpu.matmul %47, %51, %cst_16 {dimension_numbers = #tpu.dot_dimension_numbers<[2], [2], [1], [1], [0, 0, 0, 1, 1, 1], [0], [0]>} : vector<2x5x16xbf16>, vector<2x5x16xbf16>, vector<2x5x5xf32> -> vector<2x5x5xf32>
    "tpu.trace_stop"() : () -> ()
    %cst_17 = arith.constant 2.500000e-01 : f32
    %57 = vector.broadcast %cst_17 : f32 to vector<2x5x5xf32>
    %58 = arith.mulf %56, %57 : vector<2x5x5xf32>
    %cst_18 = arith.constant dense<0xFF800000> : vector<2x5xf32>
    %59 = vector.multi_reduction <maximumf>, %58, %cst_18 [2] : vector<2x5x5xf32> to vector<2x5xf32>
    %60 = vector.shape_cast %59 : vector<2x5xf32> to vector<2x5x1xf32>
    %61 = vector.broadcast %60 : vector<2x5x1xf32> to vector<2x5x5xf32>
    %62 = arith.subf %58, %61 : vector<2x5x5xf32>
    %63 = math.exp %62 : vector<2x5x5xf32>
    %cst_19 = arith.constant dense<0.000000e+00> : vector<2x5xf32>
    %64 = vector.multi_reduction <add>, %63, %cst_19 [2] : vector<2x5x5xf32> to vector<2x5xf32>
    %65 = vector.shape_cast %64 : vector<2x5xf32> to vector<2x5x1xf32>
    %66 = tpu.reciprocal %65 {approx = true} : vector<2x5x1xf32> -> vector<2x5x1xf32>
    %67 = vector.broadcast %66 : vector<2x5x1xf32> to vector<2x5x5xf32>
    %68 = arith.mulf %63, %67 : vector<2x5x5xf32>
    %69 = arith.truncf %68 : vector<2x5x5xf32> to vector<2x5x5xbf16>
    "tpu.trace_start"() <{level = 10 : i32, message = "bqk,bkd->bqd"}> : () -> ()
    %cst_20 = arith.constant dense<0.000000e+00> : vector<2x5x16xf32>
    %70 = tpu.matmul %69, %55, %cst_20 {dimension_numbers = #tpu.dot_dimension_numbers<[2], [1], [1], [2], [0, 0, 0, 1, 1, 2], [0], [0]>} : vector<2x5x5xbf16>, vector<2x5x16xbf16>, vector<2x5x16xf32> -> vector<2x5x16xf32>
    "tpu.trace_stop"() : () -> ()
    %71 = vector.extract_strided_slice %70 {offsets = [0, 0, 0], sizes = [1, 5, 16], strides = [1, 1, 1]} : vector<2x5x16xf32> to vector<1x5x16xf32>
    %72 = vector.extract_strided_slice %70 {offsets = [1, 0, 0], sizes = [1, 5, 16], strides = [1, 1, 1]} : vector<2x5x16xf32> to vector<1x5x16xf32>
    %73 = tpu.concatenate %71, %72 in 2 : vector<1x5x16xf32>, vector<1x5x16xf32> -> vector<1x5x32xf32>
    %74 = vector.shape_cast %73 : vector<1x5x32xf32> to vector<5x32xf32>
    %75 = arith.index_cast %arg1 : i32 to index
    %c0_21 = arith.constant 0 : index
    %c0_22 = arith.constant 0 : index
    %76 = vector.load %arg11[%75, %c0_21, %c0_22] : memref<2x32x32xbf16, #tpu.memory_space<vmem>>, vector<1x32x32xbf16>
    %77 = vector.shape_cast %76 : vector<1x32x32xbf16> to vector<32x32xbf16>
    %78 = arith.truncf %74 : vector<5x32xf32> to vector<5x32xbf16>
    %cst_23 = arith.constant dense<0.000000e+00> : vector<5x32xf32>
    %79 = tpu.matmul %78, %77, %cst_23 {dimension_numbers = #tpu.dot_dimension_numbers<[1], [0], [0], [1], [0, 0, 1, 1], [], []>} : vector<5x32xbf16>, vector<32x32xbf16>, vector<5x32xf32> -> vector<5x32xf32>
    %80 = arith.index_cast %arg1 : i32 to index
    %c0_24 = arith.constant 0 : index
    %c0_25 = arith.constant 0 : index
    %81 = vector.load %arg12[%80, %c0_24, %c0_25] : memref<2x1x32xf32, #tpu.memory_space<vmem>>, vector<1x1x32xf32>
    %82 = vector.shape_cast %81 : vector<1x1x32xf32> to vector<1x32xf32>
    %83 = vector.broadcast %82 : vector<1x32xf32> to vector<5x32xf32>
    %84 = arith.addf %79, %83 : vector<5x32xf32>
    %85 = arith.addf %4, %84 : vector<5x32xf32>
    %86 = arith.index_cast %arg1 : i32 to index
    %c0_26 = arith.constant 0 : index
    %c0_27 = arith.constant 0 : index
    %87 = vector.load %arg13[%86, %c0_26, %c0_27] : memref<2x1x32xf32, #tpu.memory_space<vmem>>, vector<1x1x32xf32>
    %88 = vector.shape_cast %87 : vector<1x1x32xf32> to vector<1x32xf32>
    %89 = arith.index_cast %arg1 : i32 to index
    %c0_28 = arith.constant 0 : index
    %c0_29 = arith.constant 0 : index
    %90 = vector.load %arg14[%89, %c0_28, %c0_29] : memref<2x1x32xf32, #tpu.memory_space<vmem>>, vector<1x1x32xf32>
    %91 = vector.shape_cast %90 : vector<1x1x32xf32> to vector<1x32xf32>
    %cst_30 = arith.constant dense<0.000000e+00> : vector<5xf32>
    %92 = vector.multi_reduction <add>, %85, %cst_30 [1] : vector<5x32xf32> to vector<5xf32>
    %93 = vector.shape_cast %92 : vector<5xf32> to vector<5x1xf32>
    %cst_31 = arith.constant 3.200000e+01 : f32
    %94 = vector.broadcast %cst_31 : f32 to vector<5x1xf32>
    %95 = arith.divf %93, %94 : vector<5x1xf32>
    %96 = vector.broadcast %95 : vector<5x1xf32> to vector<5x32xf32>
    %97 = arith.subf %85, %96 : vector<5x32xf32>
    %98 = arith.mulf %97, %97 : vector<5x32xf32>
    %cst_32 = arith.constant dense<0.000000e+00> : vector<5xf32>
    %99 = vector.multi_reduction <add>, %98, %cst_32 [1] : vector<5x32xf32> to vector<5xf32>
    %100 = vector.shape_cast %99 : vector<5xf32> to vector<5x1xf32>
    %cst_33 = arith.constant 3.200000e+01 : f32
    %101 = vector.broadcast %cst_33 : f32 to vector<5x1xf32>
    %102 = arith.divf %100, %101 : vector<5x1xf32>
    %103 = vector.broadcast %95 : vector<5x1xf32> to vector<5x32xf32>
    %104 = arith.subf %85, %103 : vector<5x32xf32>
    %cst_34 = arith.constant 9.99999974E-6 : f32
    %105 = vector.broadcast %cst_34 : f32 to vector<5x1xf32>
    %106 = arith.addf %102, %105 : vector<5x1xf32>
    %107 = math.rsqrt %106 : vector<5x1xf32>
    %108 = vector.broadcast %107 : vector<5x1xf32> to vector<5x32xf32>
    %109 = arith.mulf %104, %108 : vector<5x32xf32>
    %110 = vector.broadcast %88 : vector<1x32xf32> to vector<5x32xf32>
    %111 = arith.mulf %109, %110 : vector<5x32xf32>
    %112 = vector.broadcast %91 : vector<1x32xf32> to vector<5x32xf32>
    %113 = arith.addf %111, %112 : vector<5x32xf32>
    %114 = arith.index_cast %arg1 : i32 to index
    %c0_35 = arith.constant 0 : index
    %c0_36 = arith.constant 0 : index
    %115 = vector.load %arg15[%114, %c0_35, %c0_36] : memref<2x32x128xbf16, #tpu.memory_space<vmem>>, vector<1x32x128xbf16>
    %116 = vector.shape_cast %115 : vector<1x32x128xbf16> to vector<32x128xbf16>
    %117 = arith.index_cast %arg1 : i32 to index
    %c0_37 = arith.constant 0 : index
    %c0_38 = arith.constant 0 : index
    %118 = vector.load %arg17[%117, %c0_37, %c0_38] : memref<2x128x32xbf16, #tpu.memory_space<vmem>>, vector<1x128x32xbf16>
    %119 = vector.shape_cast %118 : vector<1x128x32xbf16> to vector<128x32xbf16>
    %120 = arith.truncf %113 : vector<5x32xf32> to vector<5x32xbf16>
    %cst_39 = arith.constant dense<0.000000e+00> : vector<5x128xf32>
    %121 = tpu.matmul %120, %116, %cst_39 {dimension_numbers = #tpu.dot_dimension_numbers<[1], [0], [0], [1], [0, 0, 1, 1], [], []>} : vector<5x32xbf16>, vector<32x128xbf16>, vector<5x128xf32> -> vector<5x128xf32>
    %122 = arith.index_cast %arg1 : i32 to index
    %c0_40 = arith.constant 0 : index
    %c0_41 = arith.constant 0 : index
    %123 = vector.load %arg16[%122, %c0_40, %c0_41] : memref<2x1x128xf32, #tpu.memory_space<vmem>>, vector<1x1x128xf32>
    %124 = vector.shape_cast %123 : vector<1x1x128xf32> to vector<1x128xf32>
    %125 = vector.broadcast %124 : vector<1x128xf32> to vector<5x128xf32>
    %126 = arith.addf %121, %125 : vector<5x128xf32>
    %cst_42 = arith.constant 5.000000e-01 : f32
    %127 = vector.broadcast %cst_42 : f32 to vector<5x128xf32>
    %128 = arith.mulf %127, %126 : vector<5x128xf32>
    %cst_43 = arith.constant 4.471500e-02 : f32
    %129 = vector.broadcast %cst_43 : f32 to vector<5x128xf32>
    %130 = arith.mulf %129, %126 : vector<5x128xf32>
    %131 = arith.mulf %130, %126 : vector<5x128xf32>
    %132 = arith.mulf %131, %126 : vector<5x128xf32>
    %133 = arith.addf %126, %132 : vector<5x128xf32>
    %cst_44 = arith.constant 0.797884583 : f32
    %134 = vector.broadcast %cst_44 : f32 to vector<5x128xf32>
    %135 = arith.mulf %134, %133 : vector<5x128xf32>
    %136 = math.tanh %135 : vector<5x128xf32>
    %cst_45 = arith.constant 1.000000e+00 : f32
    %137 = vector.broadcast %cst_45 : f32 to vector<5x128xf32>
    %138 = arith.addf %137, %136 : vector<5x128xf32>
    %139 = arith.mulf %128, %138 : vector<5x128xf32>
    %140 = arith.truncf %139 : vector<5x128xf32> to vector<5x128xbf16>
    %cst_46 = arith.constant dense<0.000000e+00> : vector<5x32xf32>
    %141 = tpu.matmul %140, %119, %cst_46 {dimension_numbers = #tpu.dot_dimension_numbers<[1], [0], [0], [1], [0, 0, 1, 1], [], []>} : vector<5x128xbf16>, vector<128x32xbf16>, vector<5x32xf32> -> vector<5x32xf32>
    %142 = arith.index_cast %arg1 : i32 to index
    %c0_47 = arith.constant 0 : index
    %c0_48 = arith.constant 0 : index
    %143 = vector.load %arg18[%142, %c0_47, %c0_48] : memref<2x1x32xf32, #tpu.memory_space<vmem>>, vector<1x1x32xf32>
    %144 = vector.shape_cast %143 : vector<1x1x32xf32> to vector<1x32xf32>
    %145 = vector.broadcast %144 : vector<1x32xf32> to vector<5x32xf32>
    %146 = arith.addf %141, %145 : vector<5x32xf32>
    %147 = arith.addf %85, %146 : vector<5x32xf32>
    %148 = vector.shape_cast %147 : vector<5x32xf32> to vector<1x5x32xf32>
    %c0_49 = arith.constant 0 : index
    %c0_50 = arith.constant 0 : index
    %c0_51 = arith.constant 0 : index
    %149 = vector.load %arg22[%c0_49, %c0_50, %c0_51] : memref<1x5x32xf32, #tpu.memory_space<vmem>>, vector<1x5x32xf32>
    tpu.vector_store %arg22[%c0_49, %c0_50, %c0_51], %148 {strides = array<i32>} : memref<1x5x32xf32, #tpu.memory_space<vmem>>, vector<1x5x32xf32>,
    %c1_i32 = arith.constant 1 : i32
    %150 = arith.cmpi eq, %arg1, %c1_i32 : i32
    %151 = arith.extui %150 : i1 to i32
    %c0_i32_52 = arith.constant 0 : i32
    %152 = arith.cmpi ne, %151, %c0_i32_52 : i32
    scf.if %152 {
      %c0_53 = arith.constant 0 : index
      %c0_54 = arith.constant 0 : index
      %153 = vector.load %arg19[%c0_53, %c0_54] : memref<1x32xf32, #tpu.memory_space<vmem>>, vector<1x32xf32>
      %c0_55 = arith.constant 0 : index
      %c0_56 = arith.constant 0 : index
      %154 = vector.load %arg20[%c0_55, %c0_56] : memref<1x32xf32, #tpu.memory_space<vmem>>, vector<1x32xf32>
      %cst_57 = arith.constant dense<0.000000e+00> : vector<5xf32>
      %155 = vector.multi_reduction <add>, %147, %cst_57 [1] : vector<5x32xf32> to vector<5xf32>
      %156 = vector.shape_cast %155 : vector<5xf32> to vector<5x1xf32>
      %cst_58 = arith.constant 3.200000e+01 : f32
      %157 = vector.broadcast %cst_58 : f32 to vector<5x1xf32>
      %158 = arith.divf %156, %157 : vector<5x1xf32>
      %159 = vector.broadcast %158 : vector<5x1xf32> to vector<5x32xf32>
      %160 = arith.subf %147, %159 : vector<5x32xf32>
      %161 = arith.mulf %160, %160 : vector<5x32xf32>
      %cst_59 = arith.constant dense<0.000000e+00> : vector<5xf32>
      %162 = vector.multi_reduction <add>, %161, %cst_59 [1] : vector<5x32xf32> to vector<5xf32>
      %163 = vector.shape_cast %162 : vector<5xf32> to vector<5x1xf32>
      %cst_60 = arith.constant 3.200000e+01 : f32
      %164 = vector.broadcast %cst_60 : f32 to vector<5x1xf32>
      %165 = arith.divf %163, %164 : vector<5x1xf32>
      %166 = vector.broadcast %158 : vector<5x1xf32> to vector<5x32xf32>
      %167 = arith.subf %147, %166 : vector<5x32xf32>
      %cst_61 = arith.constant 9.99999974E-6 : f32
      %168 = vector.broadcast %cst_61 : f32 to vector<5x1xf32>
      %169 = arith.addf %165, %168 : vector<5x1xf32>
      %170 = math.rsqrt %169 : vector<5x1xf32>
      %171 = vector.broadcast %170 : vector<5x1xf32> to vector<5x32xf32>
      %172 = arith.mulf %167, %171 : vector<5x32xf32>
      %173 = vector.broadcast %153 : vector<1x32xf32> to vector<5x32xf32>
      %174 = arith.mulf %172, %173 : vector<5x32xf32>
      %175 = vector.broadcast %154 : vector<1x32xf32> to vector<5x32xf32>
      %176 = arith.addf %174, %175 : vector<5x32xf32>
      %177 = vector.shape_cast %176 : vector<5x32xf32> to vector<1x5x32xf32>
      %c0_62 = arith.constant 0 : index
      %c0_63 = arith.constant 0 : index
      %c0_64 = arith.constant 0 : index
      %178 = vector.load %arg21[%c0_62, %c0_63, %c0_64] : memref<1x5x32xf32, #tpu.memory_space<vmem>>, vector<1x5x32xf32>
      tpu.vector_store %arg21[%c0_62, %c0_63, %c0_64], %177 {strides = array<i32>} : memref<1x5x32xf32, #tpu.memory_space<vmem>>, vector<1x5x32xf32>,
    } else {
    }
    return
  }
  func.func @transform_0(%arg0: i32, %arg1: i32) -> (i32, i32, i32) {
    %c0_i32 = arith.constant 0 : i32
    %c0_i32_0 = arith.constant 0 : i32
    %c0_i32_1 = arith.constant 0 : i32
    return %arg0, %c0_i32, %c0_i32_0 : i32, i32, i32
  }
  func.func @transform_1(%arg0: i32, %arg1: i32) -> (i32, i32, i32) {
    %c0_i32 = arith.constant 0 : i32
    %c0_i32_0 = arith.constant 0 : i32
    %c0_i32_1 = arith.constant 0 : i32
    return %arg0, %c0_i32, %c0_i32_0 : i32, i32, i32
  }
  func.func @transform_2(%arg0: i32, %arg1: i32) -> (i32, i32) {
    %c0_i32 = arith.constant 0 : i32
    %c0_i32_0 = arith.constant 0 : i32
    %c0_i32_1 = arith.constant 0 : i32
    return %c0_i32, %c0_i32_0 : i32, i32
  }
  func.func @transform_3(%arg0: i32, %arg1: i32) -> (i32, i32) {
    %c0_i32 = arith.constant 0 : i32
    %c0_i32_0 = arith.constant 0 : i32
    %c0_i32_1 = arith.constant 0 : i32
    return %c0_i32, %c0_i32_0 : i32, i32
  }
  func.func @transform_4(%arg0: i32, %arg1: i32) -> (i32, i32) {
    %c0_i32 = arith.constant 0 : i32
    %c0_i32_0 = arith.constant 0 : i32
    %c0_i32_1 = arith.constant 0 : i32
    return %c0_i32, %c0_i32_0 : i32, i32
  }
  func.func @transform_5(%arg0: i32, %arg1: i32) -> (i32, i32, i32) {
    %c0_i32 = arith.constant 0 : i32
    %c0_i32_0 = arith.constant 0 : i32
    %c0_i32_1 = arith.constant 0 : i32
    %c0_i32_2 = arith.constant 0 : i32
    return %c0_i32, %c0_i32_0, %c0_i32_1 : i32, i32, i32
  }
  func.func @transform_6(%arg0: i32, %arg1: i32) -> (i32, i32, i32) {
    %c0_i32 = arith.constant 0 : i32
    %c0_i32_0 = arith.constant 0 : i32
    %c0_i32_1 = arith.constant 0 : i32
    %c0_i32_2 = arith.constant 0 : i32
    return %c0_i32, %c0_i32_0, %c0_i32_1 : i32, i32, i32
  }
  func.func @transform_7(%arg0: i32, %arg1: i32) -> (i32, i32, i32) {
    %c0_i32 = arith.constant 0 : i32
    %c0_i32_0 = arith.constant 0 : i32
    %c0_i32_1 = arith.constant 0 : i32
    %c0_i32_2 = arith.constant 0 : i32
    return %c0_i32, %c0_i32_0, %c0_i32_1 : i32, i32, i32
  }
  func.func @transform_8(%arg0: i32, %arg1: i32) -> (i32, i32, i32) {
    %c0_i32 = arith.constant 0 : i32
    %c0_i32_0 = arith.constant 0 : i32
    %c0_i32_1 = arith.constant 0 : i32
    %c0_i32_2 = arith.constant 0 : i32
    return %c0_i32, %c0_i32_0, %c0_i32_1 : i32, i32, i32
  }
  func.func @transform_9(%arg0: i32, %arg1: i32) -> (i32, i32, i32) {
    %c0_i32 = arith.constant 0 : i32
    %c0_i32_0 = arith.constant 0 : i32
    %c0_i32_1 = arith.constant 0 : i32
    %c0_i32_2 = arith.constant 0 : i32
    return %c0_i32, %c0_i32_0, %c0_i32_1 : i32, i32, i32
  }
  func.func @transform_10(%arg0: i32, %arg1: i32) -> (i32, i32, i32) {
    %c0_i32 = arith.constant 0 : i32
    %c0_i32_0 = arith.constant 0 : i32
    %c0_i32_1 = arith.constant 0 : i32
    %c0_i32_2 = arith.constant 0 : i32
    return %c0_i32, %c0_i32_0, %c0_i32_1 : i32, i32, i32
  }
  func.func @transform_11(%arg0: i32, %arg1: i32) -> (i32, i32, i32) {
    %c0_i32 = arith.constant 0 : i32
    %c0_i32_0 = arith.constant 0 : i32
    %c0_i32_1 = arith.constant 0 : i32
    %c0_i32_2 = arith.constant 0 : i32
    return %c0_i32, %c0_i32_0, %c0_i32_1 : i32, i32, i32
  }
  func.func @transform_12(%arg0: i32, %arg1: i32) -> (i32, i32, i32) {
    %c0_i32 = arith.constant 0 : i32
    %c0_i32_0 = arith.constant 0 : i32
    %c0_i32_1 = arith.constant 0 : i32
    %c0_i32_2 = arith.constant 0 : i32
    return %c0_i32, %c0_i32_0, %c0_i32_1 : i32, i32, i32
  }
  func.func @transform_13(%arg0: i32, %arg1: i32) -> (i32, i32, i32) {
    %c0_i32 = arith.constant 0 : i32
    %c0_i32_0 = arith.constant 0 : i32
    %c0_i32_1 = arith.constant 0 : i32
    %c0_i32_2 = arith.constant 0 : i32
    return %c0_i32, %c0_i32_0, %c0_i32_1 : i32, i32, i32
  }
  func.func @transform_14(%arg0: i32, %arg1: i32) -> (i32, i32, i32) {
    %c0_i32 = arith.constant 0 : i32
    %c0_i32_0 = arith.constant 0 : i32
    %c0_i32_1 = arith.constant 0 : i32
    %c0_i32_2 = arith.constant 0 : i32
    return %c0_i32, %c0_i32_0, %c0_i32_1 : i32, i32, i32
  }
  func.func @transform_15(%arg0: i32, %arg1: i32) -> (i32, i32, i32) {
    %c0_i32 = arith.constant 0 : i32
    %c0_i32_0 = arith.constant 0 : i32
    %c0_i32_1 = arith.constant 0 : i32
    %c0_i32_2 = arith.constant 0 : i32
    return %c0_i32, %c0_i32_0, %c0_i32_1 : i32, i32, i32
  }
  func.func @transform_16(%arg0: i32, %arg1: i32) -> (i32, i32, i32) {
    %c0_i32 = arith.constant 0 : i32
    %c0_i32_0 = arith.constant 0 : i32
    %c0_i32_1 = arith.constant 0 : i32
    %c0_i32_2 = arith.constant 0 : i32
    return %c0_i32, %c0_i32_0, %c0_i32_1 : i32, i32, i32
  }
  func.func @transform_17(%arg0: i32, %arg1: i32) -> (i32, i32) {
    %c0_i32 = arith.constant 0 : i32
    %c0_i32_0 = arith.constant 0 : i32
    %c0_i32_1 = arith.constant 0 : i32
    return %c0_i32, %c0_i32_0 : i32, i32
  }
  func.func @transform_18(%arg0: i32, %arg1: i32) -> (i32, i32) {
    %c0_i32 = arith.constant 0 : i32
    %c0_i32_0 = arith.constant 0 : i32
    %c0_i32_1 = arith.constant 0 : i32
    return %c0_i32, %c0_i32_0 : i32, i32
  }
  func.func @transform_19(%arg0: i32, %arg1: i32) -> (i32, i32, i32) {
    %c0_i32 = arith.constant 0 : i32
    %c0_i32_0 = arith.constant 0 : i32
    %c0_i32_1 = arith.constant 0 : i32
    return %arg0, %c0_i32, %c0_i32_0 : i32, i32, i32
  }
}

</mosaic_0001>

<llo_original>
// kernel: tpu_custom_call.1
$region0: #{tpu_custom_call.1}
  #allocation0 [shape = 'u32[]', space=smem, size = 0x4, offset = 0x4, fixed_abs, tag = 'smem constant byte address 0x4 - core index']
  #allocation1 [shape = 'u32[72,128]{1,0:T(1,128)}', space=vmem, size = 0x9000, scoped, tag = 'internal scratch']
  #allocation2 [shape = 'f32[1,5,32]{2,1,0:T(8,128)}', space=vmem, size = 0x1000, scoped, tag = 'scratch operand']
  %s0 = inlined_call_operand.vmem [shape: f32[2,4,32], index: 0, kind: input, shape index: {}]
  %s1 = inlined_call_operand.vmem [shape: f32[2,4,32], index: 1, kind: input, shape index: {}]
  %s2 = inlined_call_operand.vmem [shape: f32[1,32], index: 2, kind: input, shape index: {}]
  %s3 = inlined_call_operand.vmem [shape: bf16[32,32], index: 3, kind: input, shape index: {}]
  %s4 = inlined_call_operand.vmem [shape: f32[1,32], index: 4, kind: input, shape index: {}]
  %s5 = inlined_call_operand.vmem [shape: f32[2,1,32], index: 5, kind: input, shape index: {}]
  %s6 = inlined_call_operand.vmem [shape: f32[2,1,32], index: 6, kind: input, shape index: {}]
  %s7 = inlined_call_operand.vmem [shape: bf16[2,32,96], index: 7, kind: input, shape index: {}]
  %s8 = inlined_call_operand.vmem [shape: f32[2,1,96], index: 8, kind: input, shape index: {}]
  %s9 = inlined_call_operand.vmem [shape: bf16[2,32,32], index: 9, kind: input, shape index: {}]
  %s10 = inlined_call_operand.vmem [shape: f32[2,1,32], index: 10, kind: input, shape index: {}]
  %s11 = inlined_call_operand.vmem [shape: f32[2,1,32], index: 11, kind: input, shape index: {}]
  %s12 = inlined_call_operand.vmem [shape: f32[2,1,32], index: 12, kind: input, shape index: {}]
  %s13 = inlined_call_operand.vmem [shape: bf16[2,32,128], index: 13, kind: input, shape index: {}]
  %s14 = inlined_call_operand.vmem [shape: f32[2,1,128], index: 14, kind: input, shape index: {}]
  %s15 = inlined_call_operand.vmem [shape: bf16[2,128,32], index: 15, kind: input, shape index: {}]
  %s16 = inlined_call_operand.vmem [shape: f32[2,1,32], index: 16, kind: input, shape index: {}]
  %s17 = inlined_call_operand.vmem [shape: f32[1,32], index: 17, kind: input, shape index: {}]
  %s18 = inlined_call_operand.vmem [shape: f32[1,32], index: 18, kind: input, shape index: {}]
  %s19 = inlined_call_operand.vmem [shape: f32[2,5,32], index: 19, kind: output, shape index: {}]
  %s20 = sld [smem:[#allocation0]]
  $region117: #{tpu_custom_call.1} parent=0
    _
  %s22 = ssub.s32 1, %s20
  %s23 = scalar_select 0, %s22, %s20
  loop: start=0, step=1, limit=6
  $region2: #{tpu_custom_call.1} parent=0 // loop_pre_header
    _
  $region3: #{tpu_custom_call.1} parent=0 // loop_header
    %s25 = sphi 0, %s29
    %p26 = scmp.ge.s32.totalorder %s25, 6
    %s32 = sphi 0, %s44
    %s33 = sphi 0, %s40
    %s34 = sphi 0, %s32
    %s35 = sphi 0, %s33
    %s36 = sphi 0, %s34
    %s37 = sphi 0, %s35
    %s47 = sphi 0, %s49
    %s50 = sphi 0, %s47
    %s51 = sphi 0, %s50
    %s67 = sphi 0, %s51
    %s73 = sphi 0, %s75
    %s76 = sphi 0, %s73
    %s77 = sphi 0, %s76
    %s93 = sphi 0, %s77
    %s97 = sphi 0, %s97
    %s99 = sphi 0, %s97
    %s100 = sphi 0, %s99
    %s114 = sphi 0, %s100
    %s118 = sphi 0, %s118
    %s120 = sphi 0, %s118
    %s121 = sphi 0, %s120
    %s135 = sphi 0, %s121
    %s139 = sphi 0, %s139
    %s141 = sphi 0, %s139
    %s142 = sphi 0, %s141
    %s156 = sphi 0, %s142
    %s160 = sphi 0, %s160
    %s162 = sphi 0, %s160
    %s163 = sphi 0, %s162
    %s177 = sphi 0, %s163
    %s181 = sphi 0, %s181
    %s183 = sphi 0, %s181
    %s184 = sphi 0, %s183
    %s198 = sphi 0, %s184
    %s202 = sphi 0, %s202
    %s204 = sphi 0, %s202
    %s205 = sphi 0, %s204
    %s219 = sphi 0, %s205
    %s223 = sphi 0, %s223
    %s225 = sphi 0, %s223
    %s226 = sphi 0, %s225
    %s240 = sphi 0, %s226
    %s244 = sphi 0, %s244
    %s246 = sphi 0, %s244
    %s247 = sphi 0, %s246
    %s261 = sphi 0, %s247
    %s265 = sphi 0, %s265
    %s267 = sphi 0, %s265
    %s268 = sphi 0, %s267
    %s282 = sphi 0, %s268
    %s286 = sphi 0, %s286
    %s288 = sphi 0, %s286
    %s289 = sphi 0, %s288
    %s303 = sphi 0, %s289
    %s307 = sphi 0, %s307
    %s309 = sphi 0, %s307
    %s310 = sphi 0, %s309
    %s324 = sphi 0, %s310
    %s328 = sphi 0, %s328
    %s330 = sphi 0, %s328
    %s331 = sphi 0, %s330
    %s345 = sphi 0, %s331
    %s349 = sphi 0, %s349
    %s351 = sphi 0, %s349
    %s352 = sphi 0, %s351
    %s366 = sphi 0, %s352
    %s370 = sphi 0, %s370
    %s372 = sphi 0, %s370
    %s373 = sphi 0, %s372
    %s387 = sphi 0, %s373
    %s391 = sphi 0, %s391
    %s393 = sphi 0, %s391
    %s394 = sphi 0, %s393
    %s408 = sphi 0, %s394
    %s412 = sphi 0, %s412
    %s414 = sphi 0, %s412
    %s415 = sphi 0, %s414
    %s429 = sphi 0, %s415
    %s433 = sphi 0, %s433
    %s435 = sphi 0, %s433
    %s436 = sphi 0, %s435
    %s450 = sphi 0, %s436
    %s456 = sphi 0, %s458
    %s459 = sphi 0, %s456
    %s460 = sphi 0, %s459
    %s476 = sphi 0, %s460
  $region4: #{tpu_custom_call.1} parent=0 // loop_header_branch
    %28 = sbr.rel (%p26) target = $region8
  $region5: #{tpu_custom_call.1} parent=0 // loop_body
    %s30 = ssub.s32 %s25, 1
    %s31 = ssub.s32 %s25, 2
    %s38 = sadd.s32 1, %s33
    %p39 = scmp.ge.s32.totalorder %s38, 2
    %s40 = scalar_select %p39, 0, %s38
    %s41 = sadd.s32 1, %s32
    %s42 = scalar_select %p39, %s41, %s32
    %p43 = scmp.ge.s32.totalorder %s42, 2
    %s44 = scalar_select %p43, 0, %s42
    %s45 = ssub.s32 %s32, %s44
    %p46 = scmp.eq.s32.totalorder %s45, 0
    %s48 = sadd.s32 %s47, 1
    %s49 = scalar_select %p46, %s47, %s48
    %p52 = pneg %p46
    %p53 = scmp.eq.s32.totalorder %s25, 3
    %p54 = por %p52, %p53
    %p55 = scmp.ne.s32.totalorder %s47, %s50
    %p56 = scmp.eq.s32.totalorder %s25, 0
    %p57 = por %p55, %p56
    %p58 = scmp.ne.s32.totalorder %s47, %s50
    %p59 = scmp.eq.s32.totalorder %s30, 3
    %p60 = por %p58, %p59
    %p61 = scmp.ne.s32.totalorder %s50, %s51
    %p62 = scmp.eq.s32.totalorder %s30, 0
    %p63 = por %p61, %p62
    %p64 = scmp.ne.s32.totalorder %s50, %s51
    %p65 = scmp.eq.s32.totalorder %s31, 3
    %p66 = por %p64, %p65
    %p68 = scmp.ne.s32.totalorder %s51, %s67
    %p69 = scmp.eq.s32.totalorder %s31, 0
    %p70 = por %p68, %p69
    %s71 = ssub.s32 %s32, %s44
    %p72 = scmp.eq.s32.totalorder %s71, 0
    %s74 = sadd.s32 %s73, 1
    %s75 = scalar_select %p72, %s73, %s74
    %p78 = pneg %p72
    %p79 = scmp.eq.s32.totalorder %s25, 3
    %p80 = por %p78, %p79
    %p81 = scmp.ne.s32.totalorder %s73, %s76
    %p82 = scmp.eq.s32.totalorder %s25, 0
    %p83 = por %p81, %p82
    %p84 = scmp.ne.s32.totalorder %s73, %s76
    %p85 = scmp.eq.s32.totalorder %s30, 3
    %p86 = por %p84, %p85
    %p87 = scmp.ne.s32.totalorder %s76, %s77
    %p88 = scmp.eq.s32.totalorder %s30, 0
    %p89 = por %p87, %p88
    %p90 = scmp.ne.s32.totalorder %s76, %s77
    %p91 = scmp.eq.s32.totalorder %s31, 3
    %p92 = por %p90, %p91
    %p94 = scmp.ne.s32.totalorder %s77, %s93
    %p95 = scmp.eq.s32.totalorder %s31, 0
    %p96 = por %p94, %p95
    %s98 = sadd.s32 %s97, 1
    %p101 = scmp.eq.s32.totalorder %s25, 3
    %p102 = scmp.ne.s32.totalorder %s97, %s99
    %p103 = scmp.eq.s32.totalorder %s25, 0
    %p104 = por %p102, %p103
    %p105 = scmp.ne.s32.totalorder %s97, %s99
    %p106 = scmp.eq.s32.totalorder %s30, 3
    %p107 = por %p105, %p106
    %p108 = scmp.ne.s32.totalorder %s99, %s100
    %p109 = scmp.eq.s32.totalorder %s30, 0
    %p110 = por %p108, %p109
    %p111 = scmp.ne.s32.totalorder %s99, %s100
    %p112 = scmp.eq.s32.totalorder %s31, 3
    %p113 = por %p111, %p112
    %p115 = scmp.ne.s32.totalorder %s100, %s114
    %p116 = scmp.eq.s32.totalorder %s31, 0
    %p117 = por %p115, %p116
    %s119 = sadd.s32 %s118, 1
    %p122 = scmp.eq.s32.totalorder %s25, 3
    %p123 = scmp.ne.s32.totalorder %s118, %s120
    %p124 = scmp.eq.s32.totalorder %s25, 0
    %p125 = por %p123, %p124
    %p126 = scmp.ne.s32.totalorder %s118, %s120
    %p127 = scmp.eq.s32.totalorder %s30, 3
    %p128 = por %p126, %p127
    %p129 = scmp.ne.s32.totalorder %s120, %s121
    %p130 = scmp.eq.s32.totalorder %s30, 0
    %p131 = por %p129, %p130
    %p132 = scmp.ne.s32.totalorder %s120, %s121
    %p133 = scmp.eq.s32.totalorder %s31, 3
    %p134 = por %p132, %p133
    %p136 = scmp.ne.s32.totalorder %s121, %s135
    %p137 = scmp.eq.s32.totalorder %s31, 0
    %p138 = por %p136, %p137
    %s140 = sadd.s32 %s139, 1
    %p143 = scmp.eq.s32.totalorder %s25, 3
    %p144 = scmp.ne.s32.totalorder %s139, %s141
    %p145 = scmp.eq.s32.totalorder %s25, 0
    %p146 = por %p144, %p145
    %p147 = scmp.ne.s32.totalorder %s139, %s141
    %p148 = scmp.eq.s32.totalorder %s30, 3
    %p149 = por %p147, %p148
    %p150 = scmp.ne.s32.totalorder %s141, %s142
    %p151 = scmp.eq.s32.totalorder %s30, 0
    %p152 = por %p150, %p151
    %p153 = scmp.ne.s32.totalorder %s141, %s142
    %p154 = scmp.eq.s32.totalorder %s31, 3
    %p155 = por %p153, %p154
    %p157 = scmp.ne.s32.totalorder %s142, %s156
    %p158 = scmp.eq.s32.totalorder %s31, 0
    %p159 = por %p157, %p158
    %s161 = sadd.s32 %s160, 1
    %p164 = scmp.eq.s32.totalorder %s25, 3
    %p165 = scmp.ne.s32.totalorder %s160, %s162
    %p166 = scmp.eq.s32.totalorder %s25, 0
    %p167 = por %p165, %p166
    %p168 = scmp.ne.s32.totalorder %s160, %s162
    %p169 = scmp.eq.s32.totalorder %s30, 3
    %p170 = por %p168, %p169
    %p171 = scmp.ne.s32.totalorder %s162, %s163
    %p172 = scmp.eq.s32.totalorder %s30, 0
    %p173 = por %p171, %p172
    %p174 = scmp.ne.s32.totalorder %s162, %s163
    %p175 = scmp.eq.s32.totalorder %s31, 3
    %p176 = por %p174, %p175
    %p178 = scmp.ne.s32.totalorder %s163, %s177
    %p179 = scmp.eq.s32.totalorder %s31, 0
    %p180 = por %p178, %p179
    %s182 = sadd.s32 %s181, 1
    %p185 = scmp.eq.s32.totalorder %s25, 3
    %p186 = scmp.ne.s32.totalorder %s181, %s183
    %p187 = scmp.eq.s32.totalorder %s25, 0
    %p188 = por %p186, %p187
    %p189 = scmp.ne.s32.totalorder %s181, %s183
    %p190 = scmp.eq.s32.totalorder %s30, 3
    %p191 = por %p189, %p190
    %p192 = scmp.ne.s32.totalorder %s183, %s184
    %p193 = scmp.eq.s32.totalorder %s30, 0
    %p194 = por %p192, %p193
    %p195 = scmp.ne.s32.totalorder %s183, %s184
    %p196 = scmp.eq.s32.totalorder %s31, 3
    %p197 = por %p195, %p196
    %p199 = scmp.ne.s32.totalorder %s184, %s198
    %p200 = scmp.eq.s32.totalorder %s31, 0
    %p201 = por %p199, %p200
    %s203 = sadd.s32 %s202, 1
    %p206 = scmp.eq.s32.totalorder %s25, 3
    %p207 = scmp.ne.s32.totalorder %s202, %s204
    %p208 = scmp.eq.s32.totalorder %s25, 0
    %p209 = por %p207, %p208
    %p210 = scmp.ne.s32.totalorder %s202, %s204
    %p211 = scmp.eq.s32.totalorder %s30, 3
    %p212 = por %p210, %p211
    %p213 = scmp.ne.s32.totalorder %s204, %s205
    %p214 = scmp.eq.s32.totalorder %s30, 0
    %p215 = por %p213, %p214
    %p216 = scmp.ne.s32.totalorder %s204, %s205
    %p217 = scmp.eq.s32.totalorder %s31, 3
    %p218 = por %p216, %p217
    %p220 = scmp.ne.s32.totalorder %s205, %s219
    %p221 = scmp.eq.s32.totalorder %s31, 0
    %p222 = por %p220, %p221
    %s224 = sadd.s32 %s223, 1
    %p227 = scmp.eq.s32.totalorder %s25, 3
    %p228 = scmp.ne.s32.totalorder %s223, %s225
    %p229 = scmp.eq.s32.totalorder %s25, 0
    %p230 = por %p228, %p229
    %p231 = scmp.ne.s32.totalorder %s223, %s225
    %p232 = scmp.eq.s32.totalorder %s30, 3
    %p233 = por %p231, %p232
    %p234 = scmp.ne.s32.totalorder %s225, %s226
    %p235 = scmp.eq.s32.totalorder %s30, 0
    %p236 = por %p234, %p235
    %p237 = scmp.ne.s32.totalorder %s225, %s226
    %p238 = scmp.eq.s32.totalorder %s31, 3
    %p239 = por %p237, %p238
    %p241 = scmp.ne.s32.totalorder %s226, %s240
    %p242 = scmp.eq.s32.totalorder %s31, 0
    %p243 = por %p241, %p242
    %s245 = sadd.s32 %s244, 1
    %p248 = scmp.eq.s32.totalorder %s25, 3
    %p249 = scmp.ne.s32.totalorder %s244, %s246
    %p250 = scmp.eq.s32.totalorder %s25, 0
    %p251 = por %p249, %p250
    %p252 = scmp.ne.s32.totalorder %s244, %s246
    %p253 = scmp.eq.s32.totalorder %s30, 3
    %p254 = por %p252, %p253
    %p255 = scmp.ne.s32.totalorder %s246, %s247
    %p256 = scmp.eq.s32.totalorder %s30, 0
    %p257 = por %p255, %p256
    %p258 = scmp.ne.s32.totalorder %s246, %s247
    %p259 = scmp.eq.s32.totalorder %s31, 3
    %p260 = por %p258, %p259
    %p262 = scmp.ne.s32.totalorder %s247, %s261
    %p263 = scmp.eq.s32.totalorder %s31, 0
    %p264 = por %p262, %p263
    %s266 = sadd.s32 %s265, 1
    %p269 = scmp.eq.s32.totalorder %s25, 3
    %p270 = scmp.ne.s32.totalorder %s265, %s267
    %p271 = scmp.eq.s32.totalorder %s25, 0
    %p272 = por %p270, %p271
    %p273 = scmp.ne.s32.totalorder %s265, %s267
    %p274 = scmp.eq.s32.totalorder %s30, 3
    %p275 = por %p273, %p274
    %p276 = scmp.ne.s32.totalorder %s267, %s268
    %p277 = scmp.eq.s32.totalorder %s30, 0
    %p278 = por %p276, %p277
    %p279 = scmp.ne.s32.totalorder %s267, %s268
    %p280 = scmp.eq.s32.totalorder %s31, 3
    %p281 = por %p279, %p280
    %p283 = scmp.ne.s32.totalorder %s268, %s282
    %p284 = scmp.eq.s32.totalorder %s31, 0
    %p285 = por %p283, %p284
    %s287 = sadd.s32 %s286, 1
    %p290 = scmp.eq.s32.totalorder %s25, 3
    %p291 = scmp.ne.s32.totalorder %s286, %s288
    %p292 = scmp.eq.s32.totalorder %s25, 0
    %p293 = por %p291, %p292
    %p294 = scmp.ne.s32.totalorder %s286, %s288
    %p295 = scmp.eq.s32.totalorder %s30, 3
    %p296 = por %p294, %p295
    %p297 = scmp.ne.s32.totalorder %s288, %s289
    %p298 = scmp.eq.s32.totalorder %s30, 0
    %p299 = por %p297, %p298
    %p300 = scmp.ne.s32.totalorder %s288, %s289
    %p301 = scmp.eq.s32.totalorder %s31, 3
    %p302 = por %p300, %p301
    %p304 = scmp.ne.s32.totalorder %s289, %s303
    %p305 = scmp.eq.s32.totalorder %s31, 0
    %p306 = por %p304, %p305
    %s308 = sadd.s32 %s307, 1
    %p311 = scmp.eq.s32.totalorder %s25, 3
    %p312 = scmp.ne.s32.totalorder %s307, %s309
    %p313 = scmp.eq.s32.totalorder %s25, 0
    %p314 = por %p312, %p313
    %p315 = scmp.ne.s32.totalorder %s307, %s309
    %p316 = scmp.eq.s32.totalorder %s30, 3
    %p317 = por %p315, %p316
    %p318 = scmp.ne.s32.totalorder %s309, %s310
    %p319 = scmp.eq.s32.totalorder %s30, 0
    %p320 = por %p318, %p319
    %p321 = scmp.ne.s32.totalorder %s309, %s310
    %p322 = scmp.eq.s32.totalorder %s31, 3
    %p323 = por %p321, %p322
    %p325 = scmp.ne.s32.totalorder %s310, %s324
    %p326 = scmp.eq.s32.totalorder %s31, 0
    %p327 = por %p325, %p326
    %s329 = sadd.s32 %s328, 1
    %p332 = scmp.eq.s32.totalorder %s25, 3
    %p333 = scmp.ne.s32.totalorder %s328, %s330
    %p334 = scmp.eq.s32.totalorder %s25, 0
    %p335 = por %p333, %p334
    %p336 = scmp.ne.s32.totalorder %s328, %s330
    %p337 = scmp.eq.s32.totalorder %s30, 3
    %p338 = por %p336, %p337
    %p339 = scmp.ne.s32.totalorder %s330, %s331
    %p340 = scmp.eq.s32.totalorder %s30, 0
    %p341 = por %p339, %p340
    %p342 = scmp.ne.s32.totalorder %s330, %s331
    %p343 = scmp.eq.s32.totalorder %s31, 3
    %p344 = por %p342, %p343
    %p346 = scmp.ne.s32.totalorder %s331, %s345
    %p347 = scmp.eq.s32.totalorder %s31, 0
    %p348 = por %p346, %p347
    %s350 = sadd.s32 %s349, 1
    %p353 = scmp.eq.s32.totalorder %s25, 3
    %p354 = scmp.ne.s32.totalorder %s349, %s351
    %p355 = scmp.eq.s32.totalorder %s25, 0
    %p356 = por %p354, %p355
    %p357 = scmp.ne.s32.totalorder %s349, %s351
    %p358 = scmp.eq.s32.totalorder %s30, 3
    %p359 = por %p357, %p358
    %p360 = scmp.ne.s32.totalorder %s351, %s352
    %p361 = scmp.eq.s32.totalorder %s30, 0
    %p362 = por %p360, %p361
    %p363 = scmp.ne.s32.totalorder %s351, %s352
    %p364 = scmp.eq.s32.totalorder %s31, 3
    %p365 = por %p363, %p364
    %p367 = scmp.ne.s32.totalorder %s352, %s366
    %p368 = scmp.eq.s32.totalorder %s31, 0
    %p369 = por %p367, %p368
    %s371 = sadd.s32 %s370, 1
    %p374 = scmp.eq.s32.totalorder %s25, 3
    %p375 = scmp.ne.s32.totalorder %s370, %s372
    %p376 = scmp.eq.s32.totalorder %s25, 0
    %p377 = por %p375, %p376
    %p378 = scmp.ne.s32.totalorder %s370, %s372
    %p379 = scmp.eq.s32.totalorder %s30, 3
    %p380 = por %p378, %p379
    %p381 = scmp.ne.s32.totalorder %s372, %s373
    %p382 = scmp.eq.s32.totalorder %s30, 0
    %p383 = por %p381, %p382
    %p384 = scmp.ne.s32.totalorder %s372, %s373
    %p385 = scmp.eq.s32.totalorder %s31, 3
    %p386 = por %p384, %p385
    %p388 = scmp.ne.s32.totalorder %s373, %s387
    %p389 = scmp.eq.s32.totalorder %s31, 0
    %p390 = por %p388, %p389
    %s392 = sadd.s32 %s391, 1
    %p395 = scmp.eq.s32.totalorder %s25, 3
    %p396 = scmp.ne.s32.totalorder %s391, %s393
    %p397 = scmp.eq.s32.totalorder %s25, 0
    %p398 = por %p396, %p397
    %p399 = scmp.ne.s32.totalorder %s391, %s393
    %p400 = scmp.eq.s32.totalorder %s30, 3
    %p401 = por %p399, %p400
    %p402 = scmp.ne.s32.totalorder %s393, %s394
    %p403 = scmp.eq.s32.totalorder %s30, 0
    %p404 = por %p402, %p403
    %p405 = scmp.ne.s32.totalorder %s393, %s394
    %p406 = scmp.eq.s32.totalorder %s31, 3
    %p407 = por %p405, %p406
    %p409 = scmp.ne.s32.totalorder %s394, %s408
    %p410 = scmp.eq.s32.totalorder %s31, 0
    %p411 = por %p409, %p410
    %s413 = sadd.s32 %s412, 1
    %p416 = scmp.eq.s32.totalorder %s25, 3
    %p417 = scmp.ne.s32.totalorder %s412, %s414
    %p418 = scmp.eq.s32.totalorder %s25, 0
    %p419 = por %p417, %p418
    %p420 = scmp.ne.s32.totalorder %s412, %s414
    %p421 = scmp.eq.s32.totalorder %s30, 3
    %p422 = por %p420, %p421
    %p423 = scmp.ne.s32.totalorder %s414, %s415
    %p424 = scmp.eq.s32.totalorder %s30, 0
    %p425 = por %p423, %p424
    %p426 = scmp.ne.s32.totalorder %s414, %s415
    %p427 = scmp.eq.s32.totalorder %s31, 3
    %p428 = por %p426, %p427
    %p430 = scmp.ne.s32.totalorder %s415, %s429
    %p431 = scmp.eq.s32.totalorder %s31, 0
    %p432 = por %p430, %p431
    %s434 = sadd.s32 %s433, 1
    %p437 = scmp.eq.s32.totalorder %s25, 3
    %p438 = scmp.ne.s32.totalorder %s433, %s435
    %p439 = scmp.eq.s32.totalorder %s25, 0
    %p440 = por %p438, %p439
    %p441 = scmp.ne.s32.totalorder %s433, %s435
    %p442 = scmp.eq.s32.totalorder %s30, 3
    %p443 = por %p441, %p442
    %p444 = scmp.ne.s32.totalorder %s435, %s436
    %p445 = scmp.eq.s32.totalorder %s30, 0
    %p446 = por %p444, %p445
    %p447 = scmp.ne.s32.totalorder %s435, %s436
    %p448 = scmp.eq.s32.totalorder %s31, 3
    %p449 = por %p447, %p448
    %p451 = scmp.ne.s32.totalorder %s436, %s450
    %p452 = scmp.eq.s32.totalorder %s31, 0
    %p453 = por %p451, %p452
    %s454 = ssub.s32 %s32, %s44
    %p455 = scmp.eq.s32.totalorder %s454, 0
    %s457 = sadd.s32 %s456, 1
    %s458 = scalar_select %p455, %s456, %s457
    %p461 = pneg %p455
    %p462 = scmp.eq.s32.totalorder %s25, 3
    %p463 = por %p461, %p462
    %p464 = scmp.ne.s32.totalorder %s456, %s459
    %p465 = scmp.eq.s32.totalorder %s25, 0
    %p466 = por %p464, %p465
    %p467 = scmp.ne.s32.totalorder %s456, %s459
    %p468 = scmp.eq.s32.totalorder %s30, 3
    %p469 = por %p467, %p468
    %p470 = scmp.ne.s32.totalorder %s459, %s460
    %p471 = scmp.eq.s32.totalorder %s30, 0
    %p472 = por %p470, %p471
    %p473 = scmp.ne.s32.totalorder %s459, %s460
    %p474 = scmp.eq.s32.totalorder %s31, 3
    %p475 = por %p473, %p474
    %p477 = scmp.ne.s32.totalorder %s460, %s476
    %p478 = scmp.eq.s32.totalorder %s31, 0
    %p479 = por %p477, %p478
    %p480 = scmp.le.s32.totalorder 1, %s25
    %p481 = scmp.lt.s32.totalorder %s25, 5
    %p482 = pnand %p480, %p481
    %p483 = pneg %p482
    // Predicated region
    $region9: #{tpu_custom_call.1} parent=5 // pred_check
      _
    $region10: #{tpu_custom_call.1} parent=5 // pred_check_branch
      %485 = sbr.rel (%p482) target = $region12
    $region11: #{tpu_custom_call.1} parent=5 // pred_region
      %s486 = ssub.s32 %s25, 1
      // Predicated region
      $region13: #{tpu_custom_call.1} parent=11 // pred_check
        %p487 = pneg %p110
      $region14: #{tpu_custom_call.1} parent=11 // pred_check_branch
        %489 = sbr.rel (%p487) target = $region16
      $region15: #{tpu_custom_call.1} parent=11 // pred_region
        _
      $region16: #{tpu_custom_call.1} parent=11 // pred_fallthru
        _
      // Predicated region
      $region17: #{tpu_custom_call.1} parent=11 // pred_check
        %p490 = pneg %p131
      $region18: #{tpu_custom_call.1} parent=11 // pred_check_branch
        %492 = sbr.rel (%p490) target = $region20
      $region19: #{tpu_custom_call.1} parent=11 // pred_region
        _
      $region20: #{tpu_custom_call.1} parent=11 // pred_fallthru
        _
      // Predicated region
      $region21: #{tpu_custom_call.1} parent=11 // pred_check
        %p493 = pneg %p152
      $region22: #{tpu_custom_call.1} parent=11 // pred_check_branch
        %495 = sbr.rel (%p493) target = $region24
      $region23: #{tpu_custom_call.1} parent=11 // pred_region
        _
      $region24: #{tpu_custom_call.1} parent=11 // pred_fallthru
        _
      // Predicated region
      $region25: #{tpu_custom_call.1} parent=11 // pred_check
        %p496 = pneg %p173
      $region26: #{tpu_custom_call.1} parent=11 // pred_check_branch
        %498 = sbr.rel (%p496) target = $region28
      $region27: #{tpu_custom_call.1} parent=11 // pred_region
        _
      $region28: #{tpu_custom_call.1} parent=11 // pred_fallthru
        _
      // Predicated region
      $region29: #{tpu_custom_call.1} parent=11 // pred_check
        %p499 = pneg %p194
      $region30: #{tpu_custom_call.1} parent=11 // pred_check_branch
        %501 = sbr.rel (%p499) target = $region32
      $region31: #{tpu_custom_call.1} parent=11 // pred_region
        _
      $region32: #{tpu_custom_call.1} parent=11 // pred_fallthru
        _
      // Predicated region
      $region33: #{tpu_custom_call.1} parent=11 // pred_check
        %p502 = pneg %p215
      $region34: #{tpu_custom_call.1} parent=11 // pred_check_branch
        %504 = sbr.rel (%p502) target = $region36
      $region35: #{tpu_custom_call.1} parent=11 // pred_region
        _
      $region36: #{tpu_custom_call.1} parent=11 // pred_fallthru
        _
      // Predicated region
      $region37: #{tpu_custom_call.1} parent=11 // pred_check
        %p505 = pneg %p236
      $region38: #{tpu_custom_call.1} parent=11 // pred_check_branch
        %507 = sbr.rel (%p505) target = $region40
      $region39: #{tpu_custom_call.1} parent=11 // pred_region
        _
      $region40: #{tpu_custom_call.1} parent=11 // pred_fallthru
        _
      // Predicated region
      $region41: #{tpu_custom_call.1} parent=11 // pred_check
        %p508 = pneg %p257
      $region42: #{tpu_custom_call.1} parent=11 // pred_check_branch
        %510 = sbr.rel (%p508) target = $region44
      $region43: #{tpu_custom_call.1} parent=11 // pred_region
        _
      $region44: #{tpu_custom_call.1} parent=11 // pred_fallthru
        _
      // Predicated region
      $region45: #{tpu_custom_call.1} parent=11 // pred_check
        %p511 = pneg %p278
      $region46: #{tpu_custom_call.1} parent=11 // pred_check_branch
        %513 = sbr.rel (%p511) target = $region48
      $region47: #{tpu_custom_call.1} parent=11 // pred_region
        _
      $region48: #{tpu_custom_call.1} parent=11 // pred_fallthru
        _
      // Predicated region
      $region49: #{tpu_custom_call.1} parent=11 // pred_check
        %p514 = pneg %p299
      $region50: #{tpu_custom_call.1} parent=11 // pred_check_branch
        %516 = sbr.rel (%p514) target = $region52
      $region51: #{tpu_custom_call.1} parent=11 // pred_region
        _
      $region52: #{tpu_custom_call.1} parent=11 // pred_fallthru
        _
      // Predicated region
      $region53: #{tpu_custom_call.1} parent=11 // pred_check
        %p517 = pneg %p320
      $region54: #{tpu_custom_call.1} parent=11 // pred_check_branch
        %519 = sbr.rel (%p517) target = $region56
      $region55: #{tpu_custom_call.1} parent=11 // pred_region
        _
      $region56: #{tpu_custom_call.1} parent=11 // pred_fallthru
        _
      // Predicated region
      $region57: #{tpu_custom_call.1} parent=11 // pred_check
        %p520 = pneg %p341
      $region58: #{tpu_custom_call.1} parent=11 // pred_check_branch
        %522 = sbr.rel (%p520) target = $region60
      $region59: #{tpu_custom_call.1} parent=11 // pred_region
        _
      $region60: #{tpu_custom_call.1} parent=11 // pred_fallthru
        _
      // Predicated region
      $region61: #{tpu_custom_call.1} parent=11 // pred_check
        %p523 = pneg %p362
      $region62: #{tpu_custom_call.1} parent=11 // pred_check_branch
        %525 = sbr.rel (%p523) target = $region64
      $region63: #{tpu_custom_call.1} parent=11 // pred_region
        _
      $region64: #{tpu_custom_call.1} parent=11 // pred_fallthru
        _
      // Predicated region
      $region65: #{tpu_custom_call.1} parent=11 // pred_check
        %p526 = pneg %p383
      $region66: #{tpu_custom_call.1} parent=11 // pred_check_branch
        %528 = sbr.rel (%p526) target = $region68
      $region67: #{tpu_custom_call.1} parent=11 // pred_region
        _
      $region68: #{tpu_custom_call.1} parent=11 // pred_fallthru
        _
      // Predicated region
      $region69: #{tpu_custom_call.1} parent=11 // pred_check
        %p529 = pneg %p404
      $region70: #{tpu_custom_call.1} parent=11 // pred_check_branch
        %531 = sbr.rel (%p529) target = $region72
      $region71: #{tpu_custom_call.1} parent=11 // pred_region
        _
      $region72: #{tpu_custom_call.1} parent=11 // pred_fallthru
        _
      // Predicated region
      $region73: #{tpu_custom_call.1} parent=11 // pred_check
        %p532 = pneg %p425
      $region74: #{tpu_custom_call.1} parent=11 // pred_check_branch
        %534 = sbr.rel (%p532) target = $region76
      $region75: #{tpu_custom_call.1} parent=11 // pred_region
        _
      $region76: #{tpu_custom_call.1} parent=11 // pred_fallthru
        _
      // Predicated region
      $region77: #{tpu_custom_call.1} parent=11 // pred_check
        %p535 = pneg %p446
      $region78: #{tpu_custom_call.1} parent=11 // pred_check_branch
        %537 = sbr.rel (%p535) target = $region80
      $region79: #{tpu_custom_call.1} parent=11 // pred_region
        _
      $region80: #{tpu_custom_call.1} parent=11 // pred_fallthru
        _
    $region12: #{tpu_custom_call.1} parent=5 // pred_fallthru
      _
    %p538 = scmp.lt.s32.totalorder %s25, 4
    // Predicated region
    $region81: #{tpu_custom_call.1} parent=5 // pred_check
      %p539 = pneg %p538
    $region82: #{tpu_custom_call.1} parent=5 // pred_check_branch
      %541 = sbr.rel (%p539) target = $region84
    $region83: #{tpu_custom_call.1} parent=5 // pred_region
      // Predicated region
      $region85: #{tpu_custom_call.1} parent=83 // pred_check
        %p542 = pneg %p57
      $region86: #{tpu_custom_call.1} parent=83 // pred_check_branch
        %544 = sbr.rel (%p542) target = $region88
      $region87: #{tpu_custom_call.1} parent=83 // pred_region
        %p545 = scmp.lt.s32.totalorder %s32, 1
        %s546 = scalar_select %p545, %s32, 1
        %s547 = smul.addr %s546, 4
        %s548 = scalar_lea.vmem %s0, %s547
      $region88: #{tpu_custom_call.1} parent=83 // pred_fallthru
        _
      // Predicated region
      $region89: #{tpu_custom_call.1} parent=83 // pred_check
        %p549 = pneg %p83
      $region90: #{tpu_custom_call.1} parent=83 // pred_check_branch
        %551 = sbr.rel (%p549) target = $region92
      $region91: #{tpu_custom_call.1} parent=83 // pred_region
        %p552 = scmp.lt.s32.totalorder %s32, 1
        %s553 = scalar_select %p552, %s32, 1
        %s554 = smul.addr %s553, 4
        %s555 = scalar_lea.vmem %s1, %s554
      $region92: #{tpu_custom_call.1} parent=83 // pred_fallthru
        _
    $region84: #{tpu_custom_call.1} parent=5 // pred_fallthru
      _
    %p556 = scmp.le.s32.totalorder 1, %s25
    %p557 = scmp.lt.s32.totalorder %s25, 5
    %p558 = pnand %p556, %p557
    %p559 = pneg %p558
    // Predicated region
    $region93: #{tpu_custom_call.1} parent=5 // pred_check
      _
    $region94: #{tpu_custom_call.1} parent=5 // pred_check_branch
      %561 = sbr.rel (%p558) target = $region96
    $region95: #{tpu_custom_call.1} parent=5 // pred_region
      %s562 = ssub.s32 %s25, 1
      %p563 = scmp.lt.s32.totalorder %s34, 1
      %s564 = scalar_select %p563, %s34, 1
      %s565 = smul.addr %s564, 4
      %s566 = scalar_lea.vmem %s0, %s565
      %p567 = pneg %p63
      %p568 = pneg %p60
      %p569 = scmp.lt.s32.totalorder %s34, 1
      %s570 = scalar_select %p569, %s34, 1
      %s571 = smul.addr %s570, 4
      %s572 = scalar_lea.vmem %s1, %s571
      %p573 = pneg %p89
      %p574 = pneg %p86
      %p575 = pneg %p110
      %p576 = pneg %p107
      %p577 = pneg %p131
      %p578 = pneg %p128
      %p579 = pneg %p152
      %p580 = pneg %p149
      %p581 = pneg %p173
      %p582 = pneg %p170
      %p583 = pneg %p194
      %p584 = pneg %p191
      %p585 = pneg %p215
      %p586 = pneg %p212
      %p587 = pneg %p236
      %p588 = pneg %p233
      %p589 = pneg %p257
      %p590 = pneg %p254
      %p591 = pneg %p278
      %p592 = pneg %p275
      %p593 = pneg %p299
      %p594 = pneg %p296
      %p595 = pneg %p320
      %p596 = pneg %p317
      %p597 = pneg %p341
      %p598 = pneg %p338
      %p599 = pneg %p362
      %p600 = pneg %p359
      %p601 = pneg %p383
      %p602 = pneg %p380
      %p603 = pneg %p404
      %p604 = pneg %p401
      %p605 = pneg %p425
      %p606 = pneg %p422
      %p607 = pneg %p446
      %p608 = pneg %p443
      %p609 = pneg %p472
      %p610 = pneg %p469
      %p611 = scmp.lt.s32.totalorder %s34, 1
      %s612 = scalar_select %p611, %s34, 1
      %s613 = smul.addr %s612, 8
      %s614 = scalar_lea.vmem %s19, %s613
      %p615 = scmp.lt.s32.totalorder %s34, 1
      %s616 = scalar_select %p615, %s34, 1
      %s617 = smul.addr %s616, 4
      %s618 = scalar_lea.vmem %s0, %s617
      %p619 = scmp.lt.s32.totalorder %s34, 1
      %s620 = scalar_select %p619, %s34, 1
      %s621 = smul.addr %s620, 4
      %s622 = scalar_lea.vmem %s1, %s621
      %p623 = scmp.lt.s32.totalorder %s34, 1
      %s624 = scalar_select %p623, %s34, 1
      %s625 = smul.addr %s624, 8
      %s626 = scalar_lea.vmem %s19, %s625
      %p628 = scmp.eq.s32.totalorder %s35, 0
      // Predicated region
      $region97: #{tpu_custom_call.1} parent=95 // pred_check
        %p629 = pneg %p628
      $region98: #{tpu_custom_call.1} parent=95 // pred_check_branch
        %631 = sbr.rel (%p629) target = $region100
      $region99: #{tpu_custom_call.1} parent=95 // pred_region
        %v632 = vld [vmem:[%s3] sm:$0xf]
        %v633 = vld [vmem:[%s3 + $0x4] sm:$0xf]
        %v634 = vld [vmem:[%s3 + $0x8] sm:$0xf]
        %v635 = vld [vmem:[%s3 + $0xc] sm:$0xf]
        %v636 = vld [vmem:[%s618] sm:$0xf]
        %v637 = vpack.c.bf16 %v636, %v636
        %v638 = vld [vmem:[%s4] sm:$0x1]
        %v640 = vperm.slane %v638, 0
        %v646 = vunpack.c.l.b16 %v632
        %v647 = vunpack.c.l.b16 %v633
        %v648 = vunpack.c.l.b16 %v634
        %v649 = vunpack.c.l.b16 %v635
        %v650 = vpack.c.b16 %v647, %v646
        %v651 = vpack.c.b16 %v649, %v648
        %vm654 = vcmask 261120
        %v656 = vsel %vm654, %v637, 0
        %658 = vmatpush.bf16.msra.mxu0 0
        %659 = vmatpush.bf16.msra.mxu0 0
        %660 = vmatpush.bf16.msra.mxu0 0
        %661 = vmatpush.bf16.msra.mxu0 0
        %662 = vmatpush.bf16.msra.mxu0 0
        %663 = vmatpush.bf16.msra.mxu0 0
        %664 = vmatpush.bf16.msra.mxu0 %v651
        %665 = vmatpush.bf16.msra.mxu0 %v650
        %666 = vmatmul.bf16.gmra.mxu0 %v656
        %v667 = vpop.f32.mrf.mxu0
        %v668 = vadd.f32 %v640, %v667
        %v669 = vpop.f32.mrf.mxu0
        %670 = vdwg.mxu0
        %v671 = vld [vmem:[%s622] sm:$0xf]
        %v672 = vadd.f32 %v668, %v671
        %v673 = vld [vmem:[%s2] sm:$0x1]
        %v675 = vrot.slane %v672, 7
        %vm677 = vcmask 1040384
        %v678 = vsel %vm677, %v673, %v675
        %vm679 = vcmask 258048
        %680 = vst.msk [vmem:[#allocation2] sm:$0x1f] %vm679, %v678
      $region100: #{tpu_custom_call.1} parent=95 // pred_fallthru
        _
      %v681 = vld [vmem:[#allocation2] sm:$0x1f]
      %s682 = scalar_lea.vmem %s5, %s35
      %v683 = vld [vmem:[%s682] sm:$0x1]
      %s684 = scalar_lea.vmem %s6, %s35
      %v685 = vld [vmem:[%s684] sm:$0x1]
      %vm686 = vcmask 258048
      %v687 = vsel %vm686, %v681, 0.0
      %688 = vadd.xlane.f32.xlu0 %v687
      %v689 = vpop.xlane.xlu0 %688
      %v690 = vrcp.pop 32.0
      %v691 = vmul.f32 32.0, %v690
      %v692 = vsub.f32 1.0, %v691
      %v693 = vmul.f32 %v690, %v692
      %v694 = vadd.f32 %v690, %v693
      %vm695 = vweird.f32 %v690
      %v696 = vsel %vm695, %v690, %v694
      %v697 = vmul.f32 %v689, %v696
      %v698 = vsub.f32 %v681, %v697
      %v699 = vmul.f32 %v698, %v698
      %v700 = vsel %vm686, %v699, 0.0
      %701 = vadd.xlane.f32.xlu0 %v700
      %v702 = vpop.xlane.xlu0 %701
      %v703 = vmul.f32 %v702, %v696
      %v704 = vadd.f32 %v703, 1e-05
      %v705 = vrsqrt.pop %v704
      %v706 = vmul.f32 %v705, %v704
      %v707 = vmul.f32 %v706, %v705
      %v708 = vmul.f32 0.5, %v707
      %v709 = vsub.f32 1.5, %v708
      %v710 = vmul.f32 %v705, %v709
      %vm711 = vweird.f32 %v704
      %vm712 = vweird.f32 %v705
      %vm713 = vmor %vm711, %vm712
      %v714 = vsel %vm713, %v705, %v710
      %v715 = vmul.f32 %v698, %v714
      %v717 = vperm.slane %v683, 0
      %v719 = vmul.f32 %v715, %v717
      %v721 = vperm.slane %v685, 0
      %v723 = vadd.f32 %v719, %v721
      %s724 = smul.u32 %s35, 4
      %s725 = smul.addr %s724, 4
      %s726 = scalar_lea.vmem %s7, %s725
      %v727 = vld [vmem:[%s726] sm:$0xf]
      %v728 = vld [vmem:[%s726 + $0x4] sm:$0xf]
      %v729 = vld [vmem:[%s726 + $0x8] sm:$0xf]
      %v730 = vld [vmem:[%s726 + $0xc] sm:$0xf]
      %v731 = vpack.c.bf16 %v723, %v723
      %s732 = scalar_lea.vmem %s8, %s35
      %v733 = vld [vmem:[%s732] sm:$0x1]
      %v735 = vperm.slane %v733, 0
      %v741 = vunpack.c.l.b16 %v727
      %v742 = vunpack.c.l.b16 %v728
      %v743 = vunpack.c.l.b16 %v729
      %v744 = vunpack.c.l.b16 %v730
      %v745 = vpack.c.b16 %v742, %v741
      %v746 = vpack.c.b16 %v744, %v743
      %vm749 = vcmask 261120
      %v751 = vsel %vm749, %v731, 0
      %753 = vmatpush.bf16.msra.mxu0 0
      %754 = vmatpush.bf16.msra.mxu0 0
      %755 = vmatpush.bf16.msra.mxu0 0
      %756 = vmatpush.bf16.msra.mxu0 0
      %757 = vmatpush.bf16.msra.mxu0 0
      %758 = vmatpush.bf16.msra.mxu0 0
      %759 = vmatpush.bf16.msra.mxu0 %v746
      %760 = vmatpush.bf16.msra.mxu0 %v745
      %761 = vmatmul.bf16.gmra.mxu0 %v751
      %v762 = vpop.f32.mrf.mxu0
      %v763 = vadd.f32 %v735, %v762
      %v764 = vpop.f32.mrf.mxu0
      %765 = vdwg.mxu0
      %767 = vrot.lane.b32.xlu0 %v763, 112
      %v768 = vpop.permute.xlu0 %767
      %v770 = vpack.c.bf16 %v763, %v763
      %v771 = vpack.c.bf16 %v768, %v768
      %v773 = vunpack.c.l.b16 %v770
      %v774 = vpack.c.b16 %v773, %v773
      %775 = vrot.lane.b32.xlu0 %v774, 96
      %v776 = vpop.permute.xlu0 %775
      %vm777 = vcmask 130048
      %v779 = vsel %vm777, %v770, 0
      %v782 = vsel %vm777, %v776, 0
      %784 = vmatpush.bf16.xpose.msra.mxu0 0
      %785 = vmatpush.bf16.xpose.msra.mxu0 0
      %786 = vmatpush.bf16.xpose.msra.mxu0 0
      %787 = vmatpush.bf16.xpose.msra.mxu0 0
      %788 = vmatpush.bf16.xpose.msra.mxu0 0
      %789 = vmatpush.bf16.xpose.msra.mxu0 0
      %790 = vmatpush.bf16.xpose.msra.mxu0 0
      %791 = vmatpush.bf16.xpose.msra.mxu0 %v782
      %792 = vmatmul.bf16.gmra.mxu0 %v779
      %v793 = vpop.f32.mrf.mxu0
      %v794 = vadd.f32 0.0, %v793
      %v795 = vpop.f32.mrf.mxu0
      %796 = vdwg.mxu0
      %v798 = vunpack.c.l.b16 %v771
      %v799 = vpack.c.b16 %v798, %v798
      %800 = vrot.lane.b32.xlu0 %v799, 96
      %v801 = vpop.permute.xlu0 %800
      %v803 = vsel %vm777, %v771, 0
      %v806 = vsel %vm777, %v801, 0
      %808 = vmatpush.bf16.xpose.msra.mxu0 0
      %809 = vmatpush.bf16.xpose.msra.mxu0 0
      %810 = vmatpush.bf16.xpose.msra.mxu0 0
      %811 = vmatpush.bf16.xpose.msra.mxu0 0
      %812 = vmatpush.bf16.xpose.msra.mxu0 0
      %813 = vmatpush.bf16.xpose.msra.mxu0 0
      %814 = vmatpush.bf16.xpose.msra.mxu0 0
      %815 = vmatpush.bf16.xpose.msra.mxu0 %v806
      %816 = vmatmul.bf16.gmra.mxu0 %v803
      %v817 = vpop.f32.mrf.mxu0
      %v818 = vadd.f32 0.0, %v817
      %v819 = vpop.f32.mrf.mxu0
      %820 = vdwg.mxu0
      %v821 = vmul.f32 %v794, 0.25
      %v822 = vmul.f32 %v818, 0.25
      %vm823 = vcmask 36864
      %v824 = vsel %vm823, %v821, -inf
      %825 = vmax.xlane.f32.xlu0 %v824
      %v826 = vpop.xlane.xlu0 %825
      %v827 = vsel %vm823, %v822, -inf
      %828 = vmax.xlane.f32.xlu0 %v827
      %v829 = vpop.xlane.xlu0 %828
      %v830 = vsub.f32 %v821, %v826
      %v831 = vsub.f32 %v822, %v829
      %v832 = vmul.f32 %v830, 1.442695
      %v833 = vpow.pop %v832
      %v834 = vmul.f32 %v831, 1.442695
      %v835 = vpow.pop %v834
      %v836 = vsel %vm823, %v833, 0.0
      %837 = vadd.xlane.f32.xlu0 %v836
      %v838 = vpop.xlane.xlu0 %837
      %v839 = vsel %vm823, %v835, 0.0
      %840 = vadd.xlane.f32.xlu0 %v839
      %v841 = vpop.xlane.xlu0 %840
      %v842 = vrcp.pop %v838
      %v843 = vrcp.pop %v841
      %v844 = vmul.f32 %v833, %v842
      %v845 = vmul.f32 %v835, %v843
      %v846 = vpack.c.bf16 %v844, %v844
      %v847 = vpack.c.bf16 %v845, %v845
      %848 = vrot.lane.b32.xlu0 %v774, 64
      %v849 = vpop.permute.xlu0 %848
      %vm850 = vcmask 39936
      %v852 = vsel %vm850, %v846, 0
      %vm854 = vcmask 1041408
      %vm855 = vcmask 1042432
      %v856 = vsel %vm854, 4294967295, 65535
      %v857 = vsel %vm855, %v856, 0
      %v859 = vand.u32 %v849, %v857
      %861 = vmatpush.bf16.msra.mxu0 0
      %862 = vmatpush.bf16.msra.mxu0 0
      %863 = vmatpush.bf16.msra.mxu0 0
      %864 = vmatpush.bf16.msra.mxu0 0
      %865 = vmatpush.bf16.msra.mxu0 0
      %866 = vmatpush.bf16.msra.mxu0 0
      %867 = vmatpush.bf16.msra.mxu0 0
      %868 = vmatpush.bf16.msra.mxu0 %v859
      %869 = vmatmul.bf16.gmra.mxu0 %v852
      %v870 = vpop.f32.mrf.mxu0
      %v871 = vadd.f32 0.0, %v870
      %v872 = vpop.f32.mrf.mxu0
      %873 = vdwg.mxu0
      %874 = vrot.lane.b32.xlu0 %v799, 64
      %v875 = vpop.permute.xlu0 %874
      %v877 = vsel %vm850, %v847, 0
      %v880 = vand.u32 %v875, %v857
      %882 = vmatpush.bf16.msra.mxu0 0
      %883 = vmatpush.bf16.msra.mxu0 0
      %884 = vmatpush.bf16.msra.mxu0 0
      %885 = vmatpush.bf16.msra.mxu0 0
      %886 = vmatpush.bf16.msra.mxu0 0
      %887 = vmatpush.bf16.msra.mxu0 0
      %888 = vmatpush.bf16.msra.mxu0 0
      %889 = vmatpush.bf16.msra.mxu0 %v880
      %890 = vmatmul.bf16.gmra.mxu0 %v877
      %v891 = vpop.f32.mrf.mxu0
      %v892 = vadd.f32 0.0, %v891
      %v893 = vpop.f32.mrf.mxu0
      %894 = vdwg.mxu0
      %896 = vrot.lane.b32.xlu0 %v892, 16
      %v897 = vpop.permute.xlu0 %896
      %v899 = vsel %vm777, %v871, %v897
      %s900 = smul.addr %s724, 4
      %s901 = scalar_lea.vmem %s9, %s900
      %v902 = vld [vmem:[%s901] sm:$0xf]
      %v903 = vld [vmem:[%s901 + $0x4] sm:$0xf]
      %v904 = vld [vmem:[%s901 + $0x8] sm:$0xf]
      %v905 = vld [vmem:[%s901 + $0xc] sm:$0xf]
      %v906 = vpack.c.bf16 %v899, %v899
      %s907 = scalar_lea.vmem %s10, %s35
      %v908 = vld [vmem:[%s907] sm:$0x1]
      %v910 = vperm.slane %v908, 0
      %v916 = vunpack.c.l.b16 %v902
      %v917 = vunpack.c.l.b16 %v903
      %v918 = vunpack.c.l.b16 %v904
      %v919 = vunpack.c.l.b16 %v905
      %v920 = vpack.c.b16 %v917, %v916
      %v921 = vpack.c.b16 %v919, %v918
      %v925 = vsel %vm749, %v906, 0
      %927 = vmatpush.bf16.msra.mxu0 0
      %928 = vmatpush.bf16.msra.mxu0 0
      %929 = vmatpush.bf16.msra.mxu0 0
      %930 = vmatpush.bf16.msra.mxu0 0
      %931 = vmatpush.bf16.msra.mxu0 0
      %932 = vmatpush.bf16.msra.mxu0 0
      %933 = vmatpush.bf16.msra.mxu0 %v921
      %934 = vmatpush.bf16.msra.mxu0 %v920
      %935 = vmatmul.bf16.gmra.mxu0 %v925
      %v936 = vpop.f32.mrf.mxu0
      %v937 = vadd.f32 %v910, %v936
      %v938 = vpop.f32.mrf.mxu0
      %939 = vdwg.mxu0
      %v940 = vadd.f32 %v681, %v937
      %s941 = scalar_lea.vmem %s11, %s35
      %v942 = vld [vmem:[%s941] sm:$0x1]
      %s943 = scalar_lea.vmem %s12, %s35
      %v944 = vld [vmem:[%s943] sm:$0x1]
      %v945 = vsel %vm686, %v940, 0.0
      %946 = vadd.xlane.f32.xlu0 %v945
      %v947 = vpop.xlane.xlu0 %946
      %v948 = vmul.f32 %v947, %v696
      %v949 = vsub.f32 %v940, %v948
      %v950 = vmul.f32 %v949, %v949
      %v951 = vsel %vm686, %v950, 0.0
      %952 = vadd.xlane.f32.xlu0 %v951
      %v953 = vpop.xlane.xlu0 %952
      %v954 = vmul.f32 %v953, %v696
      %v955 = vadd.f32 %v954, 1e-05
      %v956 = vrsqrt.pop %v955
      %v957 = vmul.f32 %v956, %v955
      %v958 = vmul.f32 %v957, %v956
      %v959 = vmul.f32 0.5, %v958
      %v960 = vsub.f32 1.5, %v959
      %v961 = vmul.f32 %v956, %v960
      %vm962 = vweird.f32 %v955
      %vm963 = vweird.f32 %v956
      %vm964 = vmor %vm962, %vm963
      %v965 = vsel %vm964, %v956, %v961
      %v966 = vmul.f32 %v949, %v965
      %v968 = vperm.slane %v942, 0
      %v970 = vmul.f32 %v966, %v968
      %v972 = vperm.slane %v944, 0
      %v974 = vadd.f32 %v970, %v972
      %s975 = smul.addr %s724, 4
      %s976 = scalar_lea.vmem %s13, %s975
      %v977 = vld [vmem:[%s976] sm:$0xf]
      %v978 = vld [vmem:[%s976 + $0x4] sm:$0xf]
      %v979 = vld [vmem:[%s976 + $0x8] sm:$0xf]
      %v980 = vld [vmem:[%s976 + $0xc] sm:$0xf]
      %s981 = smul.u32 %s35, 16
      %s982 = smul.addr %s981, 4
      %s983 = scalar_lea.vmem %s15, %s982
      %v984 = vld [vmem:[%s983] sm:$0xf]
      %v985 = vld [vmem:[%s983 + $0x4] sm:$0xf]
      %v986 = vld [vmem:[%s983 + $0x8] sm:$0xf]
      %v987 = vld [vmem:[%s983 + $0xc] sm:$0xf]
      %v988 = vld [vmem:[%s983 + $0x10] sm:$0xf]
      %v989 = vld [vmem:[%s983 + $0x14] sm:$0xf]
      %v990 = vld [vmem:[%s983 + $0x18] sm:$0xf]
      %v991 = vld [vmem:[%s983 + $0x1c] sm:$0xf]
      %v992 = vld [vmem:[%s983 + $0x20] sm:$0xf]
      %v993 = vld [vmem:[%s983 + $0x24] sm:$0xf]
      %v994 = vld [vmem:[%s983 + $0x28] sm:$0xf]
      %v995 = vld [vmem:[%s983 + $0x2c] sm:$0xf]
      %v996 = vld [vmem:[%s983 + $0x30] sm:$0xf]
      %v997 = vld [vmem:[%s983 + $0x34] sm:$0xf]
      %v998 = vld [vmem:[%s983 + $0x38] sm:$0xf]
      %v999 = vld [vmem:[%s983 + $0x3c] sm:$0xf]
      %v1000 = vpack.c.bf16 %v974, %v974
      %s1001 = scalar_lea.vmem %s14, %s35
      %v1002 = vld [vmem:[%s1001] sm:$0x1]
      %v1004 = vperm.slane %v1002, 0
      %v1010 = vunpack.c.l.b16 %v977
      %v1011 = vunpack.c.l.b16 %v978
      %v1012 = vunpack.c.l.b16 %v979
      %v1013 = vunpack.c.l.b16 %v980
      %v1014 = vpack.c.b16 %v1011, %v1010
      %v1015 = vpack.c.b16 %v1013, %v1012
      %v1019 = vsel %vm749, %v1000, 0
      %1021 = vmatpush.bf16.msra.mxu0 0
      %1022 = vmatpush.bf16.msra.mxu0 0
      %1023 = vmatpush.bf16.msra.mxu0 0
      %1024 = vmatpush.bf16.msra.mxu0 0
      %1025 = vmatpush.bf16.msra.mxu0 0
      %1026 = vmatpush.bf16.msra.mxu0 0
      %1027 = vmatpush.bf16.msra.mxu0 %v1015
      %1028 = vmatpush.bf16.msra.mxu0 %v1014
      %1029 = vmatmul.bf16.gmra.mxu0 %v1019
      %v1030 = vpop.f32.mrf.mxu0
      %v1031 = vadd.f32 %v1004, %v1030
      %v1032 = vpop.f32.mrf.mxu0
      %1033 = vdwg.mxu0
      %v1034 = vmul.f32 %v1031, 0.5
      %v1035 = vmul.f32 %v1031, 0.044715
      %v1036 = vmul.f32 %v1035, %v1031
      %v1037 = vmul.f32 %v1036, %v1031
      %v1038 = vadd.f32 %v1031, %v1037
      %v1039 = vmul.f32 %v1038, 0.7978846
      %v1040 = vtanh.pop %v1039
      %v1041 = vadd.f32 %v1040, 1.0
      %v1042 = vmul.f32 %v1034, %v1041
      %v1043 = vpack.c.bf16 %v1042, %v1042
      %s1044 = scalar_lea.vmem %s16, %s35
      %v1045 = vld [vmem:[%s1044] sm:$0x1]
      %v1047 = vperm.slane %v1045, 0
      %v1065 = vunpack.c.l.b16 %v984
      %v1066 = vunpack.c.l.b16 %v985
      %v1067 = vunpack.c.l.b16 %v986
      %v1068 = vunpack.c.l.b16 %v987
      %v1069 = vunpack.c.l.b16 %v988
      %v1070 = vunpack.c.l.b16 %v989
      %v1071 = vunpack.c.l.b16 %v990
      %v1072 = vunpack.c.l.b16 %v991
      %v1073 = vunpack.c.l.b16 %v992
      %v1074 = vunpack.c.l.b16 %v993
      %v1075 = vunpack.c.l.b16 %v994
      %v1076 = vunpack.c.l.b16 %v995
      %v1077 = vunpack.c.l.b16 %v996
      %v1078 = vunpack.c.l.b16 %v997
      %v1079 = vunpack.c.l.b16 %v998
      %v1080 = vunpack.c.l.b16 %v999
      %v1081 = vpack.c.b16 %v1066, %v1065
      %v1082 = vpack.c.b16 %v1068, %v1067
      %v1083 = vpack.c.b16 %v1070, %v1069
      %v1084 = vpack.c.b16 %v1072, %v1071
      %v1085 = vpack.c.b16 %v1074, %v1073
      %v1086 = vpack.c.b16 %v1076, %v1075
      %v1087 = vpack.c.b16 %v1078, %v1077
      %v1088 = vpack.c.b16 %v1080, %v1079
      %1097 = vmatpush.bf16.msra.mxu0 %v1088
      %1098 = vmatpush.bf16.msra.mxu0 %v1087
      %1099 = vmatpush.bf16.msra.mxu0 %v1086
      %1100 = vmatpush.bf16.msra.mxu0 %v1085
      %1101 = vmatpush.bf16.msra.mxu0 %v1084
      %1102 = vmatpush.bf16.msra.mxu0 %v1083
      %1103 = vmatpush.bf16.msra.mxu0 %v1082
      %1104 = vmatpush.bf16.msra.mxu0 %v1081
      %1105 = vmatmul.bf16.gmra.mxu0 %v1043
      %v1106 = vpop.f32.mrf.mxu0
      %v1107 = vadd.f32 %v1047, %v1106
      %v1108 = vpop.f32.mrf.mxu0
      %1109 = vdwg.mxu0
      %v1110 = vadd.f32 %v940, %v1107
      %1111 = vst.msk [vmem:[#allocation2] sm:$0x1f] %vm686, %v1110
      %p1112 = scmp.eq.s32.totalorder %s35, 1
      // Predicated region
      $region101: #{tpu_custom_call.1} parent=95 // pred_check
        %p1113 = pneg %p1112
      $region102: #{tpu_custom_call.1} parent=95 // pred_check_branch
        %1115 = sbr.rel (%p1113) target = $region104
      $region103: #{tpu_custom_call.1} parent=95 // pred_region
        %v1116 = vld [vmem:[%s17] sm:$0x1]
        %v1117 = vld [vmem:[%s18] sm:$0x1]
        %v1118 = vsel %vm686, %v1110, 0.0
        %1119 = vadd.xlane.f32.xlu0 %v1118
        %v1120 = vpop.xlane.xlu0 %1119
        %v1121 = vmul.f32 %v1120, %v696
        %v1122 = vsub.f32 %v1110, %v1121
        %v1123 = vmul.f32 %v1122, %v1122
        %v1124 = vsel %vm686, %v1123, 0.0
        %1125 = vadd.xlane.f32.xlu0 %v1124
        %v1126 = vpop.xlane.xlu0 %1125
        %v1127 = vmul.f32 %v1126, %v696
        %v1128 = vadd.f32 %v1127, 1e-05
        %v1129 = vrsqrt.pop %v1128
        %v1130 = vmul.f32 %v1129, %v1128
        %v1131 = vmul.f32 %v1130, %v1129
        %v1132 = vmul.f32 0.5, %v1131
        %v1133 = vsub.f32 1.5, %v1132
        %v1134 = vmul.f32 %v1129, %v1133
        %vm1135 = vweird.f32 %v1128
        %vm1136 = vweird.f32 %v1129
        %vm1137 = vmor %vm1135, %vm1136
        %v1138 = vsel %vm1137, %v1129, %v1134
        %v1139 = vmul.f32 %v1122, %v1138
        %v1141 = vperm.slane %v1116, 0
        %v1143 = vmul.f32 %v1139, %v1141
        %v1145 = vperm.slane %v1117, 0
        %v1147 = vadd.f32 %v1143, %v1145
        %1148 = vst.msk [vmem:[%s626] sm:$0x1f] %vm686, %v1147
      $region104: #{tpu_custom_call.1} parent=95 // pred_fallthru
        _
      %p1149 = scmp.lt.s32.totalorder %s34, 1
      %s1150 = scalar_select %p1149, %s34, 1
      %s1151 = smul.addr %s1150, 8
      %s1152 = scalar_lea.vmem %s19, %s1151
      // Predicated region
      $region105: #{tpu_custom_call.1} parent=95 // pred_check
        %p1153 = pneg %p469
      $region106: #{tpu_custom_call.1} parent=95 // pred_check_branch
        %1155 = sbr.rel (%p1153) target = $region108
      $region107: #{tpu_custom_call.1} parent=95 // pred_region
        _
      $region108: #{tpu_custom_call.1} parent=95 // pred_fallthru
        _
    $region96: #{tpu_custom_call.1} parent=5 // pred_fallthru
      _
    %p1156 = scmp.le.s32.totalorder 2, %s25
    // Predicated region
    $region109: #{tpu_custom_call.1} parent=5 // pred_check
      %p1157 = pneg %p1156
    $region110: #{tpu_custom_call.1} parent=5 // pred_check_branch
      %1159 = sbr.rel (%p1157) target = $region112
    $region111: #{tpu_custom_call.1} parent=5 // pred_region
      %s1160 = ssub.s32 %s25, 2
      // Predicated region
      $region113: #{tpu_custom_call.1} parent=111 // pred_check
        %p1161 = pneg %p475
      $region114: #{tpu_custom_call.1} parent=111 // pred_check_branch
        %1163 = sbr.rel (%p1161) target = $region116
      $region115: #{tpu_custom_call.1} parent=111 // pred_region
        %p1164 = scmp.lt.s32.totalorder %s36, 1
        %s1165 = scalar_select %p1164, %s36, 1
        %s1166 = smul.addr %s1165, 8
        %s1167 = scalar_lea.vmem %s19, %s1166
      $region116: #{tpu_custom_call.1} parent=111 // pred_fallthru
        _
    $region112: #{tpu_custom_call.1} parent=5 // pred_fallthru
      _
  $region6: #{tpu_custom_call.1} parent=0 // loop_footer
    %s29 = sadd.s32 1, %s25
  $region7: #{tpu_custom_call.1} parent=0 // loop_footer_branch
    %24 = sbr.rel target = $region3
  $region8: #{tpu_custom_call.1} parent=0 // loop_exit
    _

</llo_original>
